<compile_context>
chip_gen: v7x
topology: tpu7x:2x2x1
jax: 0.10.0
libtpu: 0.0.40
codegen_flags: <defaults>
</compile_context>

<pallas_src>
import functools

import jax
import jax.numpy as jnp
from jax.experimental import pallas as pl
from jax.experimental.pallas import tpu as pltpu


def _round_up(x, m):
    return (x + m - 1) // m * m


def _volume_weights_kernel(upper_ref, dens_ref, z_ref, norm_ref,
                           w_ref, aux_ref, *, last_col: int):
    z = z_ref[...]            # (TR, S_pad)
    dens = dens_ref[...]      # (TR, S_pad)
    norm = norm_ref[...]      # (TR, 1)  precomputed ||rays_d||
    S = z.shape[-1]

    # 1.0 only at the last *real* sample column (built in-register, no DMA).
    col = jax.lax.broadcasted_iota(jnp.int32, (1, S), 1)
    lastm = (col == last_col).astype(jnp.float32)                 # (1, S)

    # dists[i] = z[i+1] - z[i]; the last real column is forced to 1e10
    # (reference semantics).  roll wraps column 0 into the last slot, but that
    # slot is either the masked last-real column or a zero-density pad column.
    z_next = pltpu.roll(z, shift=S - 1, axis=1)                   # (TR, S)
    dists = (z_next - z) * (1.0 - lastm) + lastm * 1e10
    dists = dists * norm                                          # scale by ||rays_d||

    # sigma * delta;  1 - alpha = exp(-sigma*delta) exactly, so the exclusive
    # cumulative product is exp(exclusive-cumsum(-sigma*delta)) -> one MXU
    # matmul against the strictly upper-triangular 0/1 matrix, no log().
    sigma_delta = jnp.maximum(dens, 0.0) * dists                  # (TR, S)
    alpha = 1.0 - jnp.exp(-sigma_delta)
    excl_cumsum = jnp.dot(-sigma_delta, upper_ref[...],
                          preferred_element_type=jnp.float32)     # (TR, S)
    weights = alpha * jnp.exp(excl_cumsum)

    w_ref[...] = weights                                          # lane-dense store

    # tiny per-ray reductions on data already in VMEM; column-slice writes
    # (no concat -> no cross-lane shuffles).
    aux_ref[:, 0:1] = jnp.sum(weights * z, axis=-1, keepdims=True)   # depth
    aux_ref[:, 1:2] = jnp.sum(weights, axis=-1, keepdims=True)       # acc


def volume_render(rgb, density, z_vals, rays_d, *, white_bkgd=False,
                  tile_rays=1024, lane_pad=128):
    """
    Args:
      rgb:     (N_rays, N_samples, 3)
      density: (N_rays, N_samples, 1)
      z_vals:  (N_rays, N_samples)
      rays_d:  (N_rays, 3)
    Returns:
      rgb_rendered (N_rays, 3), depth (N_rays,), weights (N_rays, N_samples)
    """
    N, S = z_vals.shape

    dens = density[..., 0].astype(jnp.float32)                    # (N, S) view
    z = z_vals.astype(jnp.float32)
    rd = rays_d.astype(jnp.float32)
    norm = jnp.sqrt(jnp.sum(rd * rd, axis=-1, keepdims=True))     # (N, 1)

    # ---- tile sizes ----
    S_pad = _round_up(S, lane_pad)
    if N >= 16:
        # large tile to amortize per-step overhead, but keep >= 2 grid steps
        # so both v7x TensorCores get work.
        TR = min(_round_up(tile_rays, 8), _round_up(pl.cdiv(N, 2), 8))
    else:
        TR = _round_up(N, 8)
    N_pad = _round_up(N, TR)

    # ---- single zero-pad per array, both axes at once ----
    pn, ps = N_pad - N, S_pad - S
    if pn or ps:
        dens = jnp.pad(dens, ((0, pn), (0, ps)))
        z = jnp.pad(z, ((0, pn), (0, ps)))
        norm = jnp.pad(norm, ((0, pn), (0, 0)))

    # strictly upper-triangular 0/1 matrix driving the MXU exclusive cumsum;
    # constant index_map keeps it resident in VMEM across grid steps.
    upper = jnp.triu(jnp.ones((S_pad, S_pad), jnp.float32), k=1)

    # single-buffer the resident constant (halves its VMEM footprint; matters
    # for large S on v7x's 64 MiB VMEM).
    try:
        upper_spec = pl.BlockSpec((S_pad, S_pad), lambda i: (0, 0),
                                  pipeline_mode=pl.Buffered(1))
    except (TypeError, AttributeError):
        upper_spec = pl.BlockSpec((S_pad, S_pad), lambda i: (0, 0))

    # generous-but-bounded scoped-VMEM budget: resident constant +
    # double-buffered dens/z + double-buffered outputs + temporaries headroom.
    tile_bytes = TR * S_pad * 4
    vmem_bytes = (S_pad * S_pad * 4          # upper (single buffer)
                  + 2 * 2 * tile_bytes       # dens, z (double buffered)
                  + 2 * tile_bytes           # weights out (double buffered)
                  + 4 * TR * 128 * 4         # norm / aux blocks (lane padded)
                  + 6 * tile_bytes)          # in-kernel temporaries
    vmem_bytes = int(min(max(vmem_bytes, 16 * 1024 * 1024), 64 * 1024 * 1024))

    kernel = functools.partial(_volume_weights_kernel, last_col=S - 1)

    weights, aux = pl.pallas_call(
        kernel,
        out_shape=(
            jax.ShapeDtypeStruct((N_pad, S_pad), jnp.float32),    # weights
            jax.ShapeDtypeStruct((N_pad, 2), jnp.float32),        # [depth, acc]
        ),
        grid_spec=pl.GridSpec(
            grid=(N_pad // TR,),
            in_specs=[
                upper_spec,                                       # resident const
                pl.BlockSpec((TR, S_pad), lambda i: (i, 0)),      # density
                pl.BlockSpec((TR, S_pad), lambda i: (i, 0)),      # z_vals
                pl.BlockSpec((TR, 1), lambda i: (i, 0)),          # ||rays_d||
            ],
            out_specs=(
                pl.BlockSpec((TR, S_pad), lambda i: (i, 0)),
                pl.BlockSpec((TR, 2), lambda i: (i, 0)),
            ),
        ),
        compiler_params=pltpu.CompilerParams(
            dimension_semantics=("parallel",),
            vmem_limit_bytes=vmem_bytes),
    )(upper, dens, z, norm)

    weights_out = weights[:N, :S]
    depth_out = aux[:N, 0]
    # rgb contraction in XLA: streams rgb once in its native (N, S, 3) layout,
    # no transpose / re-layout copy of the largest input.
    rgb_out = jnp.einsum('ns,nsc->nc', weights_out, rgb.astype(jnp.float32))
    if white_bkgd:
        rgb_out = rgb_out + (1.0 - aux[:N, 1:2])
    return rgb_out, depth_out, weights_out


def _reference(rgb, density, z_vals, rays_d, white_bkgd=False):
    """Pure-JAX reference mirroring the PyTorch forward."""
    dists = z_vals[..., 1:] - z_vals[..., :-1]
    dists = jnp.concatenate(
        [dists, jnp.full_like(dists[..., :1], 1e10)], axis=-1)
    dists = dists * jnp.linalg.norm(rays_d[..., None, :], axis=-1)
    alpha = 1.0 - jnp.exp(-jax.nn.relu(density) * dists[..., None])
    trans = jnp.cumprod(
        jnp.concatenate(
            [jnp.ones_like(alpha[..., :1, :]), 1.0 - alpha + 1e-10], axis=-2),
        axis=-2)[..., :-1, :]
    weights = alpha * trans
    rgb_r = jnp.sum(weights * rgb, axis=-2)
    depth_r = jnp.sum(weights[..., 0] * z_vals, axis=-1)
    if white_bkgd:
        acc = jnp.sum(weights, axis=-2)
        rgb_r = rgb_r + (1.0 - acc)
    return rgb_r, depth_r, weights[..., 0]


if __name__ == "__main__":
    key = jax.random.PRNGKey(0)
    k1, k2, k3, k4 = jax.random.split(key, 4)

    N_rays, N_samples = 512, 64
    rgb = jax.random.uniform(k1, (N_rays, N_samples, 3), jnp.float32)
    density = jax.random.normal(k2, (N_rays, N_samples, 1), jnp.float32)
    z_vals = jnp.sort(
        jax.random.uniform(k3, (N_rays, N_samples), jnp.float32,
                           minval=2.0, maxval=6.0), axis=-1)
    rays_d = jax.random.normal(k4, (N_rays, 3), jnp.float32)

    # exercises: sample padding 64 -> 128, ray tiling 512 -> 2 x 256
    rgb_out, depth_out, weights_out = volume_render(
        rgb, density, z_vals, rays_d, white_bkgd=False)
    jax.block_until_ready((rgb_out, depth_out, weights_out))

    rgb_ref, depth_ref, weights_ref = _reference(rgb, density, z_vals, rays_d)
    assert rgb_out.shape == (N_rays, 3)
    assert depth_out.shape == (N_rays,)
    assert weights_out.shape == (N_rays, N_samples)
    assert jnp.allclose(rgb_out, rgb_ref, atol=1e-5, rtol=1e-5)
    assert jnp.allclose(depth_out, depth_ref, atol=1e-5, rtol=1e-5)
    assert jnp.allclose(weights_out, weights_ref, atol=1e-5, rtol=1e-5)

    # exercises: white background + ray padding (100 -> 2 x 56 tiles)
    rgb_out2, depth_out2, weights_out2 = volume_render(
        rgb[:100], density[:100], z_vals[:100], rays_d[:100], white_bkgd=True)
    jax.block_until_ready((rgb_out2, depth_out2, weights_out2))
    rgb_ref2, depth_ref2, weights_ref2 = _reference(
        rgb[:100], density[:100], z_vals[:100], rays_d[:100], white_bkgd=True)
    assert jnp.allclose(rgb_out2, rgb_ref2, atol=1e-5, rtol=1e-5)
    assert jnp.allclose(depth_out2, depth_ref2, atol=1e-5, rtol=1e-5)
    assert jnp.allclose(weights_out2, weights_ref2, atol=1e-5, rtol=1e-5)

    print("KERNEL_OK")
</pallas_src>

<mosaic_0001>
module attributes {stable_mosaic.version = 11 : i64} {
  func.func @_volume_weights_kernel(%arg0: i32, %arg1: memref<128x128xf32, #tpu.memory_space<vmem>>, %arg2: memref<256x128xf32, #tpu.memory_space<vmem>>, %arg3: memref<256x128xf32, #tpu.memory_space<vmem>>, %arg4: memref<256x1xf32, #tpu.memory_space<vmem>>, %arg5: memref<256x128xf32, #tpu.memory_space<vmem>>, %arg6: memref<256x2xf32, #tpu.memory_space<vmem>>) attributes {dimension_semantics = [#tpu.dimension_semantics<parallel>], iteration_bounds = array<i64: 2>, scalar_prefetch = 0 : i64, scratch_operands = 0 : i64, tpu.core_type = #tpu.core_type<tc>, window_params = [{pipeline_mode = #tpu.pipeline_mode<synchronous>, transform_indices = @transform_0, window_bounds = array<i64: 128, 128>}, {transform_indices = @transform_1, window_bounds = array<i64: 256, 128>}, {transform_indices = @transform_2, window_bounds = array<i64: 256, 128>}, {transform_indices = @transform_3, window_bounds = array<i64: 256, 1>}, {transform_indices = @transform_4, window_bounds = array<i64: 256, 128>}, {transform_indices = @transform_5, window_bounds = array<i64: 256, 2>}]} {
    %c0 = arith.constant 0 : index
    %c0_0 = arith.constant 0 : index
    %0 = vector.load %arg3[%c0, %c0_0] : memref<256x128xf32, #tpu.memory_space<vmem>>, vector<256x128xf32>
    %c0_1 = arith.constant 0 : index
    %c0_2 = arith.constant 0 : index
    %1 = vector.load %arg2[%c0_1, %c0_2] : memref<256x128xf32, #tpu.memory_space<vmem>>, vector<256x128xf32>
    %c0_3 = arith.constant 0 : index
    %c0_4 = arith.constant 0 : index
    %2 = vector.load %arg4[%c0_3, %c0_4] : memref<256x1xf32, #tpu.memory_space<vmem>>, vector<256x1xf32>
    %3 = tpu.iota {dimensions = array<i32: 1>} : vector<1x128xi32>
    %c63_i32 = arith.constant 63 : i32
    %4 = vector.broadcast %c63_i32 : i32 to vector<1x128xi32>
    %5 = arith.cmpi eq, %3, %4 : vector<1x128xi32>
    %6 = arith.extui %5 : vector<1x128xi1> to vector<1x128xi32>
    %7 = arith.sitofp %6 : vector<1x128xi32> to vector<1x128xf32>
    %c127_i32 = arith.constant 127 : i32
    %8 = tpu.dynamic_rotate %0 by %c127_i32 dim 1 : vector<256x128xf32>, i32 -> vector<256x128xf32>
    %9 = arith.subf %8, %0 : vector<256x128xf32>
    %cst = arith.constant 1.000000e+00 : f32
    %10 = vector.broadcast %cst : f32 to vector<1x128xf32>
    %11 = arith.subf %10, %7 : vector<1x128xf32>
    %12 = vector.broadcast %11 : vector<1x128xf32> to vector<256x128xf32>
    %13 = arith.mulf %9, %12 : vector<256x128xf32>
    %cst_5 = arith.constant 1.000000e+10 : f32
    %14 = vector.broadcast %cst_5 : f32 to vector<1x128xf32>
    %15 = arith.mulf %7, %14 : vector<1x128xf32>
    %16 = vector.broadcast %15 : vector<1x128xf32> to vector<256x128xf32>
    %17 = arith.addf %13, %16 : vector<256x128xf32>
    %18 = vector.broadcast %2 : vector<256x1xf32> to vector<256x128xf32>
    %19 = arith.mulf %17, %18 : vector<256x128xf32>
    %cst_6 = arith.constant 0.000000e+00 : f32
    %20 = vector.broadcast %cst_6 : f32 to vector<256x128xf32>
    %21 = arith.maximumf %1, %20 : vector<256x128xf32>
    %22 = arith.mulf %21, %19 : vector<256x128xf32>
    %cst_7 = arith.constant 0.000000e+00 : f32
    %23 = vector.broadcast %cst_7 : f32 to vector<256x128xf32>
    %24 = arith.subf %23, %22 : vector<256x128xf32>
    %25 = math.exp %24 : vector<256x128xf32>
    %cst_8 = arith.constant 1.000000e+00 : f32
    %26 = vector.broadcast %cst_8 : f32 to vector<256x128xf32>
    %27 = arith.subf %26, %25 : vector<256x128xf32>
    %cst_9 = arith.constant 0.000000e+00 : f32
    %28 = vector.broadcast %cst_9 : f32 to vector<256x128xf32>
    %29 = arith.subf %28, %22 : vector<256x128xf32>
    %c0_10 = arith.constant 0 : index
    %c0_11 = arith.constant 0 : index
    %30 = vector.load %arg1[%c0_10, %c0_11] : memref<128x128xf32, #tpu.memory_space<vmem>>, vector<128x128xf32>
    %cst_12 = arith.constant dense<0.000000e+00> : vector<256x128xf32>
    %31 = tpu.matmul %29, %30, %cst_12 {dimension_numbers = #tpu.dot_dimension_numbers<[1], [0], [0], [1], [0, 0, 1, 1], [], []>} : vector<256x128xf32>, vector<128x128xf32>, vector<256x128xf32> -> vector<256x128xf32>
    %32 = math.exp %31 : vector<256x128xf32>
    %33 = arith.mulf %27, %32 : vector<256x128xf32>
    %c0_13 = arith.constant 0 : index
    %c0_14 = arith.constant 0 : index
    %34 = vector.load %arg5[%c0_13, %c0_14] : memref<256x128xf32, #tpu.memory_space<vmem>>, vector<256x128xf32>
    tpu.vector_store %arg5[%c0_13, %c0_14], %33 {strides = array<i32>} : memref<256x128xf32, #tpu.memory_space<vmem>>, vector<256x128xf32>,
    %35 = arith.mulf %33, %0 : vector<256x128xf32>
    %cst_15 = arith.constant dense<0.000000e+00> : vector<256xf32>
    %36 = vector.multi_reduction <add>, %35, %cst_15 [1] : vector<256x128xf32> to vector<256xf32>
    %37 = vector.shape_cast %36 : vector<256xf32> to vector<256x1xf32>
    %c0_16 = arith.constant 0 : index
    %c0_17 = arith.constant 0 : index
    %38 = vector.load %arg6[%c0_16, %c0_17] : memref<256x2xf32, #tpu.memory_space<vmem>>, vector<256x1xf32>
    tpu.vector_store %arg6[%c0_16, %c0_17], %37 {strides = array<i32>} : memref<256x2xf32, #tpu.memory_space<vmem>>, vector<256x1xf32>,
    %cst_18 = arith.constant dense<0.000000e+00> : vector<256xf32>
    %39 = vector.multi_reduction <add>, %33, %cst_18 [1] : vector<256x128xf32> to vector<256xf32>
    %40 = vector.shape_cast %39 : vector<256xf32> to vector<256x1xf32>
    %c0_19 = arith.constant 0 : index
    %c1 = arith.constant 1 : index
    %41 = vector.load %arg6[%c0_19, %c1] : memref<256x2xf32, #tpu.memory_space<vmem>>, vector<256x1xf32>
    tpu.vector_store %arg6[%c0_19, %c1], %40 {strides = array<i32>} : memref<256x2xf32, #tpu.memory_space<vmem>>, vector<256x1xf32>,
    return
  }
  func.func @transform_0(%arg0: i32) -> (i32, i32) {
    %c0_i32 = arith.constant 0 : i32
    %c0_i32_0 = arith.constant 0 : i32
    %c0_i32_1 = arith.constant 0 : i32
    return %c0_i32, %c0_i32_0 : i32, i32
  }
  func.func @transform_1(%arg0: i32) -> (i32, i32) {
    %c0_i32 = arith.constant 0 : i32
    %c0_i32_0 = arith.constant 0 : i32
    return %arg0, %c0_i32 : i32, i32
  }
  func.func @transform_2(%arg0: i32) -> (i32, i32) {
    %c0_i32 = arith.constant 0 : i32
    %c0_i32_0 = arith.constant 0 : i32
    return %arg0, %c0_i32 : i32, i32
  }
  func.func @transform_3(%arg0: i32) -> (i32, i32) {
    %c0_i32 = arith.constant 0 : i32
    %c0_i32_0 = arith.constant 0 : i32
    return %arg0, %c0_i32 : i32, i32
  }
  func.func @transform_4(%arg0: i32) -> (i32, i32) {
    %c0_i32 = arith.constant 0 : i32
    %c0_i32_0 = arith.constant 0 : i32
    return %arg0, %c0_i32 : i32, i32
  }
  func.func @transform_5(%arg0: i32) -> (i32, i32) {
    %c0_i32 = arith.constant 0 : i32
    %c0_i32_0 = arith.constant 0 : i32
    return %arg0, %c0_i32 : i32, i32
  }
}

</mosaic_0001>

<llo_original>
// kernel: tpu_custom_call.1
$region0: #{tpu_custom_call.1}
  #allocation0 [shape = 'u32[]', space=smem, size = 0x4, offset = 0x4, fixed_abs, tag = 'smem constant byte address 0x4 - core index']
  #allocation1 [shape = 'u32[144,128]{1,0:T(1,128)}', space=vmem, size = 0x12000, scoped, tag = 'internal scratch']
  %s0 = inlined_call_operand.hbm [shape: f32[128,128], index: 0, kind: input, shape index: {}]
  %s1 = inlined_call_operand.vmem [shape: f32[512,128], index: 1, kind: input, shape index: {}]
  %s2 = inlined_call_operand.hbm [shape: f32[512,128], index: 2, kind: input, shape index: {}]
  %s3 = inlined_call_operand.vmem [shape: f32[512,1], index: 3, kind: input, shape index: {}]
  %s4 = inlined_call_operand.hbm [shape: f32[512,128], index: 4, kind: output, shape index: {0}]
  %s5 = inlined_call_operand.vmem [shape: f32[512,2], index: 5, kind: output, shape index: {1}]
  %6 = xla_tuple %s4, %s5
  %s7 = sld [smem:[#allocation0]]
  $region65: #{tpu_custom_call.1} parent=0
    _
  %s9 = ssub.s32 1, %s7
  %s10 = scalar_select 0, %s9, %s7
  $region1: #{tpu_custom_call.1} parent=0
    #allocation2 [shape = 'u8[65536]{0}', space=vmem, size = 0x10000, scoped, tag = 'input window, operand 0, single buffered']
    #allocation3 [shape = 's32[2]{0}', space=sflag, size = 0x8, scoped, tag = 'scoped memory for tpu_custom_call.1']
    #allocation4 [shape = 's32[2]{0}', space=sflag, size = 0x8, scoped, tag = 'scoped memory for tpu_custom_call.1']
    #allocation5 [shape = 'u8[262144]{0}', space=vmem, size = 0x40000, scoped, tag = 'input window, operand 2']
    #allocation6 [shape = 's32[2]{0}', space=sflag, size = 0x8, scoped, tag = 'scoped memory for tpu_custom_call.1']
    #allocation7 [shape = 'u8[262144]{0}', space=vmem, size = 0x40000, scoped, tag = 'output window, operand 0']
    %11 = vsyncpa [#allocation3], 0
    %12 = vsyncpa [#allocation6], 0
    %s13 = scalar_lea.sflag [#allocation6], 1
    %14 = vsyncpa %s13, 0
    %15 = vsyncpa [#allocation4], 0
    %s16 = scalar_lea.sflag [#allocation4], 1
    %17 = vsyncpa %s16, 0
    loop: start=0, step=1, limit=4
    $region2: #{tpu_custom_call.1} parent=1 // loop_pre_header
      _
    $region3: #{tpu_custom_call.1} parent=1 // loop_header
      %s19 = sphi 0, %s23
      %p20 = scmp.ge.s32.totalorder %s19, 4
      %s27 = sphi 0, %s27
      %s29 = sphi 0, %s27
      %s30 = sphi 0, %s29
      %s44 = sphi 0, %s30
      %s50 = sphi 0, %s52
      %s53 = sphi 0, %s50
      %s54 = sphi 0, %s53
      %s70 = sphi 0, %s54
      %s76 = sphi 0, %s78
      %s79 = sphi 0, %s76
      %s80 = sphi 0, %s79
      %s96 = sphi 0, %s80
      %s102 = sphi 0, %s104
      %s105 = sphi 0, %s102
      %s106 = sphi 0, %s105
      %s122 = sphi 0, %s106
      %s128 = sphi 0, %s130
      %s131 = sphi 0, %s128
      %s132 = sphi 0, %s131
      %s148 = sphi 0, %s132
      %s154 = sphi 0, %s156
      %s157 = sphi 0, %s154
      %s158 = sphi 0, %s157
      %s174 = sphi 0, %s158
    $region4: #{tpu_custom_call.1} parent=1 // loop_header_branch
      %22 = sbr.rel (%p20) target = $region8
    $region5: #{tpu_custom_call.1} parent=1 // loop_body
      %s24 = ssub.s32 %s19, 1
      %s25 = ssub.s32 %s19, 2
      %s26 = sadd.s32 %s19, 1
      %s28 = sadd.s32 %s27, 1
      %p31 = scmp.eq.s32.totalorder %s19, 1
      %p32 = scmp.ne.s32.totalorder %s27, %s29
      %p33 = scmp.eq.s32.totalorder %s19, 0
      %p34 = por %p32, %p33
      %p35 = scmp.ne.s32.totalorder %s27, %s29
      %p36 = scmp.eq.s32.totalorder %s24, 1
      %p37 = por %p35, %p36
      %p38 = scmp.ne.s32.totalorder %s29, %s30
      %p39 = scmp.eq.s32.totalorder %s24, 0
      %p40 = por %p38, %p39
      %p41 = scmp.ne.s32.totalorder %s29, %s30
      %p42 = scmp.eq.s32.totalorder %s25, 1
      %p43 = por %p41, %p42
      %p45 = scmp.ne.s32.totalorder %s30, %s44
      %p46 = scmp.eq.s32.totalorder %s25, 0
      %p47 = por %p45, %p46
      %s48 = ssub.s32 %s19, %s26
      %p49 = scmp.eq.s32.totalorder %s48, 0
      %s51 = sadd.s32 %s50, 1
      %s52 = scalar_select %p49, %s50, %s51
      %p55 = pneg %p49
      %p56 = scmp.eq.s32.totalorder %s19, 1
      %p57 = por %p55, %p56
      %p58 = scmp.ne.s32.totalorder %s50, %s53
      %p59 = scmp.eq.s32.totalorder %s19, 0
      %p60 = por %p58, %p59
      %p61 = scmp.ne.s32.totalorder %s50, %s53
      %p62 = scmp.eq.s32.totalorder %s24, 1
      %p63 = por %p61, %p62
      %p64 = scmp.ne.s32.totalorder %s53, %s54
      %p65 = scmp.eq.s32.totalorder %s24, 0
      %p66 = por %p64, %p65
      %p67 = scmp.ne.s32.totalorder %s53, %s54
      %p68 = scmp.eq.s32.totalorder %s25, 1
      %p69 = por %p67, %p68
      %p71 = scmp.ne.s32.totalorder %s54, %s70
      %p72 = scmp.eq.s32.totalorder %s25, 0
      %p73 = por %p71, %p72
      %s74 = ssub.s32 %s19, %s26
      %p75 = scmp.eq.s32.totalorder %s74, 0
      %s77 = sadd.s32 %s76, 1
      %s78 = scalar_select %p75, %s76, %s77
      %p81 = pneg %p75
      %p82 = scmp.eq.s32.totalorder %s19, 1
      %p83 = por %p81, %p82
      %p84 = scmp.ne.s32.totalorder %s76, %s79
      %p85 = scmp.eq.s32.totalorder %s19, 0
      %p86 = por %p84, %p85
      %p87 = scmp.ne.s32.totalorder %s76, %s79
      %p88 = scmp.eq.s32.totalorder %s24, 1
      %p89 = por %p87, %p88
      %p90 = scmp.ne.s32.totalorder %s79, %s80
      %p91 = scmp.eq.s32.totalorder %s24, 0
      %p92 = por %p90, %p91
      %p93 = scmp.ne.s32.totalorder %s79, %s80
      %p94 = scmp.eq.s32.totalorder %s25, 1
      %p95 = por %p93, %p94
      %p97 = scmp.ne.s32.totalorder %s80, %s96
      %p98 = scmp.eq.s32.totalorder %s25, 0
      %p99 = por %p97, %p98
      %s100 = ssub.s32 %s19, %s26
      %p101 = scmp.eq.s32.totalorder %s100, 0
      %s103 = sadd.s32 %s102, 1
      %s104 = scalar_select %p101, %s102, %s103
      %p107 = pneg %p101
      %p108 = scmp.eq.s32.totalorder %s19, 1
      %p109 = por %p107, %p108
      %p110 = scmp.ne.s32.totalorder %s102, %s105
      %p111 = scmp.eq.s32.totalorder %s19, 0
      %p112 = por %p110, %p111
      %p113 = scmp.ne.s32.totalorder %s102, %s105
      %p114 = scmp.eq.s32.totalorder %s24, 1
      %p115 = por %p113, %p114
      %p116 = scmp.ne.s32.totalorder %s105, %s106
      %p117 = scmp.eq.s32.totalorder %s24, 0
      %p118 = por %p116, %p117
      %p119 = scmp.ne.s32.totalorder %s105, %s106
      %p120 = scmp.eq.s32.totalorder %s25, 1
      %p121 = por %p119, %p120
      %p123 = scmp.ne.s32.totalorder %s106, %s122
      %p124 = scmp.eq.s32.totalorder %s25, 0
      %p125 = por %p123, %p124
      %s126 = ssub.s32 %s19, %s26
      %p127 = scmp.eq.s32.totalorder %s126, 0
      %s129 = sadd.s32 %s128, 1
      %s130 = scalar_select %p127, %s128, %s129
      %p133 = pneg %p127
      %p134 = scmp.eq.s32.totalorder %s19, 1
      %p135 = por %p133, %p134
      %p136 = scmp.ne.s32.totalorder %s128, %s131
      %p137 = scmp.eq.s32.totalorder %s19, 0
      %p138 = por %p136, %p137
      %p139 = scmp.ne.s32.totalorder %s128, %s131
      %p140 = scmp.eq.s32.totalorder %s24, 1
      %p141 = por %p139, %p140
      %p142 = scmp.ne.s32.totalorder %s131, %s132
      %p143 = scmp.eq.s32.totalorder %s24, 0
      %p144 = por %p142, %p143
      %p145 = scmp.ne.s32.totalorder %s131, %s132
      %p146 = scmp.eq.s32.totalorder %s25, 1
      %p147 = por %p145, %p146
      %p149 = scmp.ne.s32.totalorder %s132, %s148
      %p150 = scmp.eq.s32.totalorder %s25, 0
      %p151 = por %p149, %p150
      %s152 = ssub.s32 %s19, %s26
      %p153 = scmp.eq.s32.totalorder %s152, 0
      %s155 = sadd.s32 %s154, 1
      %s156 = scalar_select %p153, %s154, %s155
      %p159 = pneg %p153
      %p160 = scmp.eq.s32.totalorder %s19, 1
      %p161 = por %p159, %p160
      %p162 = scmp.ne.s32.totalorder %s154, %s157
      %p163 = scmp.eq.s32.totalorder %s19, 0
      %p164 = por %p162, %p163
      %p165 = scmp.ne.s32.totalorder %s154, %s157
      %p166 = scmp.eq.s32.totalorder %s24, 1
      %p167 = por %p165, %p166
      %p168 = scmp.ne.s32.totalorder %s157, %s158
      %p169 = scmp.eq.s32.totalorder %s24, 0
      %p170 = por %p168, %p169
      %p171 = scmp.ne.s32.totalorder %s157, %s158
      %p172 = scmp.eq.s32.totalorder %s25, 1
      %p173 = por %p171, %p172
      %p175 = scmp.ne.s32.totalorder %s158, %s174
      %p176 = scmp.eq.s32.totalorder %s25, 0
      %p177 = por %p175, %p176
      %p178 = scmp.le.s32.totalorder 1, %s19
      %p179 = scmp.lt.s32.totalorder %s19, 3
      %p180 = pnand %p178, %p179
      %p181 = pneg %p180
      // Predicated region
      $region9: #{tpu_custom_call.1} parent=5 // pred_check
        _
      $region10: #{tpu_custom_call.1} parent=5 // pred_check_branch
        %183 = sbr.rel (%p180) target = $region12
      $region11: #{tpu_custom_call.1} parent=5 // pred_region
        %s184 = ssub.s32 %s19, 1
        // Predicated region
        $region13: #{tpu_custom_call.1} parent=11 // pred_check
          %p185 = pneg %p40
        $region14: #{tpu_custom_call.1} parent=11 // pred_check_branch
          %187 = sbr.rel (%p185) target = $region16
        $region15: #{tpu_custom_call.1} parent=11 // pred_region
          %s189 = ssub.s32 2048, 2048
          %190 = vsyncadd [#allocation3], %s189
          %s191 = sshll.u32 [#allocation2], 4
          %s192 = int_to_ptr.vmem [resolvable:$true] %s191
          %197 = dma.hbm_to_vmem [thread:$0]  %s0, 2048, %s192, [#allocation3], 128, 128, 8
        $region16: #{tpu_custom_call.1} parent=11 // pred_fallthru
          _
      $region12: #{tpu_custom_call.1} parent=5 // pred_fallthru
        _
      %p198 = scmp.lt.s32.totalorder %s19, 2
      // Predicated region
      $region17: #{tpu_custom_call.1} parent=5 // pred_check
        %p199 = pneg %p198
      $region18: #{tpu_custom_call.1} parent=5 // pred_check_branch
        %201 = sbr.rel (%p199) target = $region20
      $region19: #{tpu_custom_call.1} parent=5 // pred_region
        // Predicated region
        $region21: #{tpu_custom_call.1} parent=19 // pred_check
          %p202 = pneg %p60
        $region22: #{tpu_custom_call.1} parent=19 // pred_check_branch
          %204 = sbr.rel (%p202) target = $region24
        $region23: #{tpu_custom_call.1} parent=19 // pred_region
          %s205 = smul.u32 32, %s19
          %p206 = scmp.lt.s32.totalorder %s205, 63
          %s207 = scalar_select %p206, %s205, 63
          %s208 = smul.addr %s207, 8
          %s209 = scalar_lea.vmem %s1, %s208
          %s210 = smul.u32 32, %s19
        $region24: #{tpu_custom_call.1} parent=19 // pred_fallthru
          _
        // Predicated region
        $region25: #{tpu_custom_call.1} parent=19 // pred_check
          %p211 = pneg %p86
        $region26: #{tpu_custom_call.1} parent=19 // pred_check_branch
          %213 = sbr.rel (%p211) target = $region28
        $region27: #{tpu_custom_call.1} parent=19 // pred_region
          %s214 = sand.u32 %s76, 1
          %s215 = scalar_lea.sflag [#allocation6], %s214
          %s216 = sand.u32 %s76, 1
          %s217 = smul.addr %s216, 256
          %s218 = scalar_lea.vmem [#allocation5], %s217
          %s219 = smul.u32 32, %s19
          %s221 = ssub.s32 4096, 4096
          %222 = vsyncadd %s215, %s221
          %s223 = smul.addr %s219, 128
          %s224 = scalar_lea.hbm %s2, %s223
          %s225 = sshll.u32 %s218, 4
          %s226 = int_to_ptr.vmem [resolvable:$true] %s225
          %231 = dma.hbm_to_vmem [thread:$0]  %s224, 4096, %s226, %s215, 128, 128, 8
        $region28: #{tpu_custom_call.1} parent=19 // pred_fallthru
          _
        // Predicated region
        $region29: #{tpu_custom_call.1} parent=19 // pred_check
          %p232 = pneg %p112
        $region30: #{tpu_custom_call.1} parent=19 // pred_check_branch
          %234 = sbr.rel (%p232) target = $region32
        $region31: #{tpu_custom_call.1} parent=19 // pred_region
          %s235 = smul.u32 32, %s19
          %p236 = scmp.lt.s32.totalorder %s235, 63
          %s237 = scalar_select %p236, %s235, 63
          %s238 = smul.addr %s237, 8
          %s239 = scalar_lea.vmem %s3, %s238
          %s240 = smul.u32 32, %s19
        $region32: #{tpu_custom_call.1} parent=19 // pred_fallthru
          _
      $region20: #{tpu_custom_call.1} parent=5 // pred_fallthru
        _
      %p241 = scmp.le.s32.totalorder 1, %s19
      %p242 = scmp.lt.s32.totalorder %s19, 3
      %p243 = pnand %p241, %p242
      %p244 = pneg %p243
      // Predicated region
      $region33: #{tpu_custom_call.1} parent=5 // pred_check
        _
      $region34: #{tpu_custom_call.1} parent=5 // pred_check_branch
        %246 = sbr.rel (%p243) target = $region36
      $region35: #{tpu_custom_call.1} parent=5 // pred_region
        %s247 = ssub.s32 %s19, 1
        // Predicated region
        $region37: #{tpu_custom_call.1} parent=35 // pred_check
          %p248 = pneg %p40
        $region38: #{tpu_custom_call.1} parent=35 // pred_check_branch
          %250 = sbr.rel (%p248) target = $region40
        $region39: #{tpu_custom_call.1} parent=35 // pred_region
          %251 = dma.done [#allocation3], 2048
        $region40: #{tpu_custom_call.1} parent=35 // pred_fallthru
          _
        %s252 = sand.u32 %s79, 1
        %s253 = scalar_lea.sflag [#allocation6], %s252
        %s254 = sand.u32 %s79, 1
        %s255 = smul.addr %s254, 256
        %s256 = scalar_lea.vmem [#allocation5], %s255
        // Predicated region
        $region41: #{tpu_custom_call.1} parent=35 // pred_check
          %p257 = pneg %p92
        $region42: #{tpu_custom_call.1} parent=35 // pred_check_branch
          %259 = sbr.rel (%p257) target = $region44
        $region43: #{tpu_custom_call.1} parent=35 // pred_region
          %260 = dma.done %s253, 4096
        $region44: #{tpu_custom_call.1} parent=35 // pred_fallthru
          _
        %p261 = pneg %p40
        %p262 = pneg %p37
        %s263 = smul.u32 32, %s24
        %p264 = scmp.lt.s32.totalorder %s263, 63
        %s265 = scalar_select %p264, %s263, 63
        %s266 = smul.addr %s265, 8
        %s267 = scalar_lea.vmem %s1, %s266
        %p268 = pneg %p66
        %p269 = pneg %p63
        %s270 = sand.u32 %s79, 1
        %s271 = scalar_lea.sflag [#allocation6], %s270
        %s272 = sand.u32 %s79, 1
        %s273 = smul.addr %s272, 256
        %s274 = scalar_lea.vmem [#allocation5], %s273
        %p275 = pneg %p92
        %p276 = pneg %p89
        %s277 = smul.u32 32, %s24
        %p278 = scmp.lt.s32.totalorder %s277, 63
        %s279 = scalar_select %p278, %s277, 63
        %s280 = smul.addr %s279, 8
        %s281 = scalar_lea.vmem %s3, %s280
        %p282 = pneg %p118
        %p283 = pneg %p115
        %p284 = pneg %p144
        %p285 = pneg %p141
        %s286 = sand.u32 %s131, 1
        %s287 = scalar_lea.sflag [#allocation4], %s286
        %s288 = sand.u32 %s131, 1
        %s289 = smul.addr %s288, 256
        %s290 = scalar_lea.vmem [#allocation7], %s289
        %p291 = pneg %p170
        %p292 = pneg %p167
        %s293 = smul.u32 32, %s24
        %p294 = scmp.lt.s32.totalorder %s293, 63
        %s295 = scalar_select %p294, %s293, 63
        %s296 = smul.addr %s295, 8
        %s297 = scalar_lea.vmem %s5, %s296
        %s298 = smul.u32 32, %s24
        %p299 = scmp.lt.s32.totalorder %s298, 63
        %s300 = scalar_select %p299, %s298, 63
        %s301 = smul.addr %s300, 8
        %s302 = scalar_lea.vmem %s1, %s301
        %s303 = smul.u32 32, %s24
        %s304 = smul.u32 32, %s24
        %s305 = smul.u32 32, %s24
        %p306 = scmp.lt.s32.totalorder %s305, 63
        %s307 = scalar_select %p306, %s305, 63
        %s308 = smul.addr %s307, 8
        %s309 = scalar_lea.vmem %s3, %s308
        %s310 = smul.u32 32, %s24
        %s311 = smul.u32 32, %s24
        %s312 = smul.u32 32, %s24
        %p313 = scmp.lt.s32.totalorder %s312, 63
        %s314 = scalar_select %p313, %s312, 63
        %s315 = smul.addr %s314, 8
        %s316 = scalar_lea.vmem %s5, %s315
        %s317 = smul.u32 32, %s24
        %v318 = vld [vmem:[%s256] sm:$0xff]
        %v319 = vld [vmem:[%s256 + $0x8] sm:$0xff]
        %v320 = vld [vmem:[%s256 + $0x10] sm:$0xff]
        %v321 = vld [vmem:[%s256 + $0x18] sm:$0xff]
        %v322 = vld [vmem:[%s256 + $0x20] sm:$0xff]
        %v323 = vld [vmem:[%s256 + $0x28] sm:$0xff]
        %v324 = vld [vmem:[%s256 + $0x30] sm:$0xff]
        %v325 = vld [vmem:[%s256 + $0x38] sm:$0xff]
        %v326 = vld [vmem:[%s256 + $0x40] sm:$0xff]
        %v327 = vld [vmem:[%s256 + $0x48] sm:$0xff]
        %v328 = vld [vmem:[%s256 + $0x50] sm:$0xff]
        %v329 = vld [vmem:[%s256 + $0x58] sm:$0xff]
        %v330 = vld [vmem:[%s256 + $0x60] sm:$0xff]
        %v331 = vld [vmem:[%s256 + $0x68] sm:$0xff]
        %v332 = vld [vmem:[%s256 + $0x70] sm:$0xff]
        %v333 = vld [vmem:[%s256 + $0x78] sm:$0xff]
        %v334 = vld [vmem:[%s256 + $0x80] sm:$0xff]
        %v335 = vld [vmem:[%s256 + $0x88] sm:$0xff]
        %v336 = vld [vmem:[%s256 + $0x90] sm:$0xff]
        %v337 = vld [vmem:[%s256 + $0x98] sm:$0xff]
        %v338 = vld [vmem:[%s256 + $0xa0] sm:$0xff]
        %v339 = vld [vmem:[%s256 + $0xa8] sm:$0xff]
        %v340 = vld [vmem:[%s256 + $0xb0] sm:$0xff]
        %v341 = vld [vmem:[%s256 + $0xb8] sm:$0xff]
        %v342 = vld [vmem:[%s256 + $0xc0] sm:$0xff]
        %v343 = vld [vmem:[%s256 + $0xc8] sm:$0xff]
        %v344 = vld [vmem:[%s256 + $0xd0] sm:$0xff]
        %v345 = vld [vmem:[%s256 + $0xd8] sm:$0xff]
        %v346 = vld [vmem:[%s256 + $0xe0] sm:$0xff]
        %v347 = vld [vmem:[%s256 + $0xe8] sm:$0xff]
        %v348 = vld [vmem:[%s256 + $0xf0] sm:$0xff]
        %v349 = vld [vmem:[%s256 + $0xf8] sm:$0xff]
        %v350 = vld [vmem:[%s302] sm:$0xff]
        %v351 = vld [vmem:[%s302 + $0x8] sm:$0xff]
        %v352 = vld [vmem:[%s302 + $0x10] sm:$0xff]
        %v353 = vld [vmem:[%s302 + $0x18] sm:$0xff]
        %v354 = vld [vmem:[%s302 + $0x20] sm:$0xff]
        %v355 = vld [vmem:[%s302 + $0x28] sm:$0xff]
        %v356 = vld [vmem:[%s302 + $0x30] sm:$0xff]
        %v357 = vld [vmem:[%s302 + $0x38] sm:$0xff]
        %v358 = vld [vmem:[%s302 + $0x40] sm:$0xff]
        %v359 = vld [vmem:[%s302 + $0x48] sm:$0xff]
        %v360 = vld [vmem:[%s302 + $0x50] sm:$0xff]
        %v361 = vld [vmem:[%s302 + $0x58] sm:$0xff]
        %v362 = vld [vmem:[%s302 + $0x60] sm:$0xff]
        %v363 = vld [vmem:[%s302 + $0x68] sm:$0xff]
        %v364 = vld [vmem:[%s302 + $0x70] sm:$0xff]
        %v365 = vld [vmem:[%s302 + $0x78] sm:$0xff]
        %v366 = vld [vmem:[%s302 + $0x80] sm:$0xff]
        %v367 = vld [vmem:[%s302 + $0x88] sm:$0xff]
        %v368 = vld [vmem:[%s302 + $0x90] sm:$0xff]
        %v369 = vld [vmem:[%s302 + $0x98] sm:$0xff]
        %v370 = vld [vmem:[%s302 + $0xa0] sm:$0xff]
        %v371 = vld [vmem:[%s302 + $0xa8] sm:$0xff]
        %v372 = vld [vmem:[%s302 + $0xb0] sm:$0xff]
        %v373 = vld [vmem:[%s302 + $0xb8] sm:$0xff]
        %v374 = vld [vmem:[%s302 + $0xc0] sm:$0xff]
        %v375 = vld [vmem:[%s302 + $0xc8] sm:$0xff]
        %v376 = vld [vmem:[%s302 + $0xd0] sm:$0xff]
        %v377 = vld [vmem:[%s302 + $0xd8] sm:$0xff]
        %v378 = vld [vmem:[%s302 + $0xe0] sm:$0xff]
        %v379 = vld [vmem:[%s302 + $0xe8] sm:$0xff]
        %v380 = vld [vmem:[%s302 + $0xf0] sm:$0xff]
        %v381 = vld [vmem:[%s302 + $0xf8] sm:$0xff]
        %v382 = vld [vmem:[%s309] sm:$0xff]
        %v383 = vld [vmem:[%s309 + $0x8] sm:$0xff]
        %v384 = vld [vmem:[%s309 + $0x10] sm:$0xff]
        %v385 = vld [vmem:[%s309 + $0x18] sm:$0xff]
        %v386 = vld [vmem:[%s309 + $0x20] sm:$0xff]
        %v387 = vld [vmem:[%s309 + $0x28] sm:$0xff]
        %v388 = vld [vmem:[%s309 + $0x30] sm:$0xff]
        %v389 = vld [vmem:[%s309 + $0x38] sm:$0xff]
        %v390 = vld [vmem:[%s309 + $0x40] sm:$0xff]
        %v391 = vld [vmem:[%s309 + $0x48] sm:$0xff]
        %v392 = vld [vmem:[%s309 + $0x50] sm:$0xff]
        %v393 = vld [vmem:[%s309 + $0x58] sm:$0xff]
        %v394 = vld [vmem:[%s309 + $0x60] sm:$0xff]
        %v395 = vld [vmem:[%s309 + $0x68] sm:$0xff]
        %v396 = vld [vmem:[%s309 + $0x70] sm:$0xff]
        %v397 = vld [vmem:[%s309 + $0x78] sm:$0xff]
        %v398 = vld [vmem:[%s309 + $0x80] sm:$0xff]
        %v399 = vld [vmem:[%s309 + $0x88] sm:$0xff]
        %v400 = vld [vmem:[%s309 + $0x90] sm:$0xff]
        %v401 = vld [vmem:[%s309 + $0x98] sm:$0xff]
        %v402 = vld [vmem:[%s309 + $0xa0] sm:$0xff]
        %v403 = vld [vmem:[%s309 + $0xa8] sm:$0xff]
        %v404 = vld [vmem:[%s309 + $0xb0] sm:$0xff]
        %v405 = vld [vmem:[%s309 + $0xb8] sm:$0xff]
        %v406 = vld [vmem:[%s309 + $0xc0] sm:$0xff]
        %v407 = vld [vmem:[%s309 + $0xc8] sm:$0xff]
        %v408 = vld [vmem:[%s309 + $0xd0] sm:$0xff]
        %v409 = vld [vmem:[%s309 + $0xd8] sm:$0xff]
        %v410 = vld [vmem:[%s309 + $0xe0] sm:$0xff]
        %v411 = vld [vmem:[%s309 + $0xe8] sm:$0xff]
        %v412 = vld [vmem:[%s309 + $0xf0] sm:$0xff]
        %v413 = vld [vmem:[%s309 + $0xf8] sm:$0xff]
        %v414 = vlaneseq
        %v415 = vand.u32 %v414, 127
        %vm416 = vcmp.eq.s32.totalorder %v415, 63
        %v417 = vsel %vm416, 1, 0
        %v418 = vcvt.s32.f32 %v417
        %419 = vrot.lane.b32.xlu0 %v318, 127
        %v420 = vpop.permute.xlu0 %419
        %421 = vrot.lane.b32.xlu0 %v319, 127
        %v422 = vpop.permute.xlu0 %421
        %423 = vrot.lane.b32.xlu0 %v320, 127
        %v424 = vpop.permute.xlu0 %423
        %425 = vrot.lane.b32.xlu0 %v321, 127
        %v426 = vpop.permute.xlu0 %425
        %427 = vrot.lane.b32.xlu0 %v322, 127
        %v428 = vpop.permute.xlu0 %427
        %429 = vrot.lane.b32.xlu0 %v323, 127
        %v430 = vpop.permute.xlu0 %429
        %431 = vrot.lane.b32.xlu0 %v324, 127
        %v432 = vpop.permute.xlu0 %431
        %433 = vrot.lane.b32.xlu0 %v325, 127
        %v434 = vpop.permute.xlu0 %433
        %435 = vrot.lane.b32.xlu0 %v326, 127
        %v436 = vpop.permute.xlu0 %435
        %437 = vrot.lane.b32.xlu0 %v327, 127
        %v438 = vpop.permute.xlu0 %437
        %439 = vrot.lane.b32.xlu0 %v328, 127
        %v440 = vpop.permute.xlu0 %439
        %441 = vrot.lane.b32.xlu0 %v329, 127
        %v442 = vpop.permute.xlu0 %441
        %443 = vrot.lane.b32.xlu0 %v330, 127
        %v444 = vpop.permute.xlu0 %443
        %445 = vrot.lane.b32.xlu0 %v331, 127
        %v446 = vpop.permute.xlu0 %445
        %447 = vrot.lane.b32.xlu0 %v332, 127
        %v448 = vpop.permute.xlu0 %447
        %449 = vrot.lane.b32.xlu0 %v333, 127
        %v450 = vpop.permute.xlu0 %449
        %451 = vrot.lane.b32.xlu0 %v334, 127
        %v452 = vpop.permute.xlu0 %451
        %453 = vrot.lane.b32.xlu0 %v335, 127
        %v454 = vpop.permute.xlu0 %453
        %455 = vrot.lane.b32.xlu0 %v336, 127
        %v456 = vpop.permute.xlu0 %455
        %457 = vrot.lane.b32.xlu0 %v337, 127
        %v458 = vpop.permute.xlu0 %457
        %459 = vrot.lane.b32.xlu0 %v338, 127
        %v460 = vpop.permute.xlu0 %459
        %461 = vrot.lane.b32.xlu0 %v339, 127
        %v462 = vpop.permute.xlu0 %461
        %463 = vrot.lane.b32.xlu0 %v340, 127
        %v464 = vpop.permute.xlu0 %463
        %465 = vrot.lane.b32.xlu0 %v341, 127
        %v466 = vpop.permute.xlu0 %465
        %467 = vrot.lane.b32.xlu0 %v342, 127
        %v468 = vpop.permute.xlu0 %467
        %469 = vrot.lane.b32.xlu0 %v343, 127
        %v470 = vpop.permute.xlu0 %469
        %471 = vrot.lane.b32.xlu0 %v344, 127
        %v472 = vpop.permute.xlu0 %471
        %473 = vrot.lane.b32.xlu0 %v345, 127
        %v474 = vpop.permute.xlu0 %473
        %475 = vrot.lane.b32.xlu0 %v346, 127
        %v476 = vpop.permute.xlu0 %475
        %477 = vrot.lane.b32.xlu0 %v347, 127
        %v478 = vpop.permute.xlu0 %477
        %479 = vrot.lane.b32.xlu0 %v348, 127
        %v480 = vpop.permute.xlu0 %479
        %481 = vrot.lane.b32.xlu0 %v349, 127
        %v482 = vpop.permute.xlu0 %481
        %v483 = vsub.f32 %v420, %v318
        %v484 = vsub.f32 %v422, %v319
        %v485 = vsub.f32 %v424, %v320
        %v486 = vsub.f32 %v426, %v321
        %v487 = vsub.f32 %v428, %v322
        %v488 = vsub.f32 %v430, %v323
        %v489 = vsub.f32 %v432, %v324
        %v490 = vsub.f32 %v434, %v325
        %v491 = vsub.f32 %v436, %v326
        %v492 = vsub.f32 %v438, %v327
        %v493 = vsub.f32 %v440, %v328
        %v494 = vsub.f32 %v442, %v329
        %v495 = vsub.f32 %v444, %v330
        %v496 = vsub.f32 %v446, %v331
        %v497 = vsub.f32 %v448, %v332
        %v498 = vsub.f32 %v450, %v333
        %v499 = vsub.f32 %v452, %v334
        %v500 = vsub.f32 %v454, %v335
        %v501 = vsub.f32 %v456, %v336
        %v502 = vsub.f32 %v458, %v337
        %v503 = vsub.f32 %v460, %v338
        %v504 = vsub.f32 %v462, %v339
        %v505 = vsub.f32 %v464, %v340
        %v506 = vsub.f32 %v466, %v341
        %v507 = vsub.f32 %v468, %v342
        %v508 = vsub.f32 %v470, %v343
        %v509 = vsub.f32 %v472, %v344
        %v510 = vsub.f32 %v474, %v345
        %v511 = vsub.f32 %v476, %v346
        %v512 = vsub.f32 %v478, %v347
        %v513 = vsub.f32 %v480, %v348
        %v514 = vsub.f32 %v482, %v349
        %v515 = vsub.f32 1.0, %v418
        %v516 = vmul.f32 %v483, %v515
        %v517 = vmul.f32 %v484, %v515
        %v518 = vmul.f32 %v485, %v515
        %v519 = vmul.f32 %v486, %v515
        %v520 = vmul.f32 %v487, %v515
        %v521 = vmul.f32 %v488, %v515
        %v522 = vmul.f32 %v489, %v515
        %v523 = vmul.f32 %v490, %v515
        %v524 = vmul.f32 %v491, %v515
        %v525 = vmul.f32 %v492, %v515
        %v526 = vmul.f32 %v493, %v515
        %v527 = vmul.f32 %v494, %v515
        %v528 = vmul.f32 %v495, %v515
        %v529 = vmul.f32 %v496, %v515
        %v530 = vmul.f32 %v497, %v515
        %v531 = vmul.f32 %v498, %v515
        %v532 = vmul.f32 %v499, %v515
        %v533 = vmul.f32 %v500, %v515
        %v534 = vmul.f32 %v501, %v515
        %v535 = vmul.f32 %v502, %v515
        %v536 = vmul.f32 %v503, %v515
        %v537 = vmul.f32 %v504, %v515
        %v538 = vmul.f32 %v505, %v515
        %v539 = vmul.f32 %v506, %v515
        %v540 = vmul.f32 %v507, %v515
        %v541 = vmul.f32 %v508, %v515
        %v542 = vmul.f32 %v509, %v515
        %v543 = vmul.f32 %v510, %v515
        %v544 = vmul.f32 %v511, %v515
        %v545 = vmul.f32 %v512, %v515
        %v546 = vmul.f32 %v513, %v515
        %v547 = vmul.f32 %v514, %v515
        %v548 = vmul.f32 %v418, 1e+10
        %v549 = vadd.f32 %v516, %v548
        %v550 = vadd.f32 %v517, %v548
        %v551 = vadd.f32 %v518, %v548
        %v552 = vadd.f32 %v519, %v548
        %v553 = vadd.f32 %v520, %v548
        %v554 = vadd.f32 %v521, %v548
        %v555 = vadd.f32 %v522, %v548
        %v556 = vadd.f32 %v523, %v548
        %v557 = vadd.f32 %v524, %v548
        %v558 = vadd.f32 %v525, %v548
        %v559 = vadd.f32 %v526, %v548
        %v560 = vadd.f32 %v527, %v548
        %v561 = vadd.f32 %v528, %v548
        %v562 = vadd.f32 %v529, %v548
        %v563 = vadd.f32 %v530, %v548
        %v564 = vadd.f32 %v531, %v548
        %v565 = vadd.f32 %v532, %v548
        %v566 = vadd.f32 %v533, %v548
        %v567 = vadd.f32 %v534, %v548
        %v568 = vadd.f32 %v535, %v548
        %v569 = vadd.f32 %v536, %v548
        %v570 = vadd.f32 %v537, %v548
        %v571 = vadd.f32 %v538, %v548
        %v572 = vadd.f32 %v539, %v548
        %v573 = vadd.f32 %v540, %v548
        %v574 = vadd.f32 %v541, %v548
        %v575 = vadd.f32 %v542, %v548
        %v576 = vadd.f32 %v543, %v548
        %v577 = vadd.f32 %v544, %v548
        %v578 = vadd.f32 %v545, %v548
        %v579 = vadd.f32 %v546, %v548
        %v580 = vadd.f32 %v547, %v548
        %582 = vset.pattern.permute.xlu0 0
        %583 = vperm.xlu0 %582, %v382
        %v584 = vpop.permute.xlu0 %583
        %587 = vset.pattern.permute.xlu0 0
        %588 = vperm.xlu0 %587, %v383
        %v589 = vpop.permute.xlu0 %588
        %592 = vset.pattern.permute.xlu0 0
        %593 = vperm.xlu0 %592, %v384
        %v594 = vpop.permute.xlu0 %593
        %597 = vset.pattern.permute.xlu0 0
        %598 = vperm.xlu0 %597, %v385
        %v599 = vpop.permute.xlu0 %598
        %602 = vset.pattern.permute.xlu0 0
        %603 = vperm.xlu0 %602, %v386
        %v604 = vpop.permute.xlu0 %603
        %607 = vset.pattern.permute.xlu0 0
        %608 = vperm.xlu0 %607, %v387
        %v609 = vpop.permute.xlu0 %608
        %612 = vset.pattern.permute.xlu0 0
        %613 = vperm.xlu0 %612, %v388
        %v614 = vpop.permute.xlu0 %613
        %617 = vset.pattern.permute.xlu0 0
        %618 = vperm.xlu0 %617, %v389
        %v619 = vpop.permute.xlu0 %618
        %622 = vset.pattern.permute.xlu0 0
        %623 = vperm.xlu0 %622, %v390
        %v624 = vpop.permute.xlu0 %623
        %627 = vset.pattern.permute.xlu0 0
        %628 = vperm.xlu0 %627, %v391
        %v629 = vpop.permute.xlu0 %628
        %632 = vset.pattern.permute.xlu0 0
        %633 = vperm.xlu0 %632, %v392
        %v634 = vpop.permute.xlu0 %633
        %637 = vset.pattern.permute.xlu0 0
        %638 = vperm.xlu0 %637, %v393
        %v639 = vpop.permute.xlu0 %638
        %642 = vset.pattern.permute.xlu0 0
        %643 = vperm.xlu0 %642, %v394
        %v644 = vpop.permute.xlu0 %643
        %647 = vset.pattern.permute.xlu0 0
        %648 = vperm.xlu0 %647, %v395
        %v649 = vpop.permute.xlu0 %648
        %652 = vset.pattern.permute.xlu0 0
        %653 = vperm.xlu0 %652, %v396
        %v654 = vpop.permute.xlu0 %653
        %657 = vset.pattern.permute.xlu0 0
        %658 = vperm.xlu0 %657, %v397
        %v659 = vpop.permute.xlu0 %658
        %662 = vset.pattern.permute.xlu0 0
        %663 = vperm.xlu0 %662, %v398
        %v664 = vpop.permute.xlu0 %663
        %667 = vset.pattern.permute.xlu0 0
        %668 = vperm.xlu0 %667, %v399
        %v669 = vpop.permute.xlu0 %668
        %672 = vset.pattern.permute.xlu0 0
        %673 = vperm.xlu0 %672, %v400
        %v674 = vpop.permute.xlu0 %673
        %677 = vset.pattern.permute.xlu0 0
        %678 = vperm.xlu0 %677, %v401
        %v679 = vpop.permute.xlu0 %678
        %682 = vset.pattern.permute.xlu0 0
        %683 = vperm.xlu0 %682, %v402
        %v684 = vpop.permute.xlu0 %683
        %687 = vset.pattern.permute.xlu0 0
        %688 = vperm.xlu0 %687, %v403
        %v689 = vpop.permute.xlu0 %688
        %692 = vset.pattern.permute.xlu0 0
        %693 = vperm.xlu0 %692, %v404
        %v694 = vpop.permute.xlu0 %693
        %697 = vset.pattern.permute.xlu0 0
        %698 = vperm.xlu0 %697, %v405
        %v699 = vpop.permute.xlu0 %698
        %702 = vset.pattern.permute.xlu0 0
        %703 = vperm.xlu0 %702, %v406
        %v704 = vpop.permute.xlu0 %703
        %707 = vset.pattern.permute.xlu0 0
        %708 = vperm.xlu0 %707, %v407
        %v709 = vpop.permute.xlu0 %708
        %712 = vset.pattern.permute.xlu0 0
        %713 = vperm.xlu0 %712, %v408
        %v714 = vpop.permute.xlu0 %713
        %717 = vset.pattern.permute.xlu0 0
        %718 = vperm.xlu0 %717, %v409
        %v719 = vpop.permute.xlu0 %718
        %722 = vset.pattern.permute.xlu0 0
        %723 = vperm.xlu0 %722, %v410
        %v724 = vpop.permute.xlu0 %723
        %727 = vset.pattern.permute.xlu0 0
        %728 = vperm.xlu0 %727, %v411
        %v729 = vpop.permute.xlu0 %728
        %732 = vset.pattern.permute.xlu0 0
        %733 = vperm.xlu0 %732, %v412
        %v734 = vpop.permute.xlu0 %733
        %737 = vset.pattern.permute.xlu0 0
        %738 = vperm.xlu0 %737, %v413
        %v739 = vpop.permute.xlu0 %738
        %v741 = vmul.f32 %v549, %v584
        %v742 = vmul.f32 %v550, %v589
        %v743 = vmul.f32 %v551, %v594
        %v744 = vmul.f32 %v552, %v599
        %v745 = vmul.f32 %v553, %v604
        %v746 = vmul.f32 %v554, %v609
        %v747 = vmul.f32 %v555, %v614
        %v748 = vmul.f32 %v556, %v619
        %v749 = vmul.f32 %v557, %v624
        %v750 = vmul.f32 %v558, %v629
        %v751 = vmul.f32 %v559, %v634
        %v752 = vmul.f32 %v560, %v639
        %v753 = vmul.f32 %v561, %v644
        %v754 = vmul.f32 %v562, %v649
        %v755 = vmul.f32 %v563, %v654
        %v756 = vmul.f32 %v564, %v659
        %v757 = vmul.f32 %v565, %v664
        %v758 = vmul.f32 %v566, %v669
        %v759 = vmul.f32 %v567, %v674
        %v760 = vmul.f32 %v568, %v679
        %v761 = vmul.f32 %v569, %v684
        %v762 = vmul.f32 %v570, %v689
        %v763 = vmul.f32 %v571, %v694
        %v764 = vmul.f32 %v572, %v699
        %v765 = vmul.f32 %v573, %v704
        %v766 = vmul.f32 %v574, %v709
        %v767 = vmul.f32 %v575, %v714
        %v768 = vmul.f32 %v576, %v719
        %v769 = vmul.f32 %v577, %v724
        %v770 = vmul.f32 %v578, %v729
        %v771 = vmul.f32 %v579, %v734
        %v772 = vmul.f32 %v580, %v739
        %v773 = vmax.f32 %v350, 0.0
        %v774 = vmax.f32 %v351, 0.0
        %v775 = vmax.f32 %v352, 0.0
        %v776 = vmax.f32 %v353, 0.0
        %v777 = vmax.f32 %v354, 0.0
        %v778 = vmax.f32 %v355, 0.0
        %v779 = vmax.f32 %v356, 0.0
        %v780 = vmax.f32 %v357, 0.0
        %v781 = vmax.f32 %v358, 0.0
        %v782 = vmax.f32 %v359, 0.0
        %v783 = vmax.f32 %v360, 0.0
        %v784 = vmax.f32 %v361, 0.0
        %v785 = vmax.f32 %v362, 0.0
        %v786 = vmax.f32 %v363, 0.0
        %v787 = vmax.f32 %v364, 0.0
        %v788 = vmax.f32 %v365, 0.0
        %v789 = vmax.f32 %v366, 0.0
        %v790 = vmax.f32 %v367, 0.0
        %v791 = vmax.f32 %v368, 0.0
        %v792 = vmax.f32 %v369, 0.0
        %v793 = vmax.f32 %v370, 0.0
        %v794 = vmax.f32 %v371, 0.0
        %v795 = vmax.f32 %v372, 0.0
        %v796 = vmax.f32 %v373, 0.0
        %v797 = vmax.f32 %v374, 0.0
        %v798 = vmax.f32 %v375, 0.0
        %v799 = vmax.f32 %v376, 0.0
        %v800 = vmax.f32 %v377, 0.0
        %v801 = vmax.f32 %v378, 0.0
        %v802 = vmax.f32 %v379, 0.0
        %v803 = vmax.f32 %v380, 0.0
        %v804 = vmax.f32 %v381, 0.0
        %v805 = vmul.f32 %v773, %v741
        %v806 = vmul.f32 %v774, %v742
        %v807 = vmul.f32 %v775, %v743
        %v808 = vmul.f32 %v776, %v744
        %v809 = vmul.f32 %v777, %v745
        %v810 = vmul.f32 %v778, %v746
        %v811 = vmul.f32 %v779, %v747
        %v812 = vmul.f32 %v780, %v748
        %v813 = vmul.f32 %v781, %v749
        %v814 = vmul.f32 %v782, %v750
        %v815 = vmul.f32 %v783, %v751
        %v816 = vmul.f32 %v784, %v752
        %v817 = vmul.f32 %v785, %v753
        %v818 = vmul.f32 %v786, %v754
        %v819 = vmul.f32 %v787, %v755
        %v820 = vmul.f32 %v788, %v756
        %v821 = vmul.f32 %v789, %v757
        %v822 = vmul.f32 %v790, %v758
        %v823 = vmul.f32 %v791, %v759
        %v824 = vmul.f32 %v792, %v760
        %v825 = vmul.f32 %v793, %v761
        %v826 = vmul.f32 %v794, %v762
        %v827 = vmul.f32 %v795, %v763
        %v828 = vmul.f32 %v796, %v764
        %v829 = vmul.f32 %v797, %v765
        %v830 = vmul.f32 %v798, %v766
        %v831 = vmul.f32 %v799, %v767
        %v832 = vmul.f32 %v800, %v768
        %v833 = vmul.f32 %v801, %v769
        %v834 = vmul.f32 %v802, %v770
        %v835 = vmul.f32 %v803, %v771
        %v836 = vmul.f32 %v804, %v772
        %v837 = vsub.f32 0.0, %v805
        %v838 = vsub.f32 0.0, %v806
        %v839 = vsub.f32 0.0, %v807
        %v840 = vsub.f32 0.0, %v808
        %v841 = vsub.f32 0.0, %v809
        %v842 = vsub.f32 0.0, %v810
        %v843 = vsub.f32 0.0, %v811
        %v844 = vsub.f32 0.0, %v812
        %v845 = vsub.f32 0.0, %v813
        %v846 = vsub.f32 0.0, %v814
        %v847 = vsub.f32 0.0, %v815
        %v848 = vsub.f32 0.0, %v816
        %v849 = vsub.f32 0.0, %v817
        %v850 = vsub.f32 0.0, %v818
        %v851 = vsub.f32 0.0, %v819
        %v852 = vsub.f32 0.0, %v820
        %v853 = vsub.f32 0.0, %v821
        %v854 = vsub.f32 0.0, %v822
        %v855 = vsub.f32 0.0, %v823
        %v856 = vsub.f32 0.0, %v824
        %v857 = vsub.f32 0.0, %v825
        %v858 = vsub.f32 0.0, %v826
        %v859 = vsub.f32 0.0, %v827
        %v860 = vsub.f32 0.0, %v828
        %v861 = vsub.f32 0.0, %v829
        %v862 = vsub.f32 0.0, %v830
        %v863 = vsub.f32 0.0, %v831
        %v864 = vsub.f32 0.0, %v832
        %v865 = vsub.f32 0.0, %v833
        %v866 = vsub.f32 0.0, %v834
        %v867 = vsub.f32 0.0, %v835
        %v868 = vsub.f32 0.0, %v836
        %v869 = vmul.f32 %v837, 1.442695
        %v870 = vpow.pop %v869
        %v871 = vmul.f32 %v838, 1.442695
        %v872 = vpow.pop %v871
        %v873 = vmul.f32 %v839, 1.442695
        %v874 = vpow.pop %v873
        %v875 = vmul.f32 %v840, 1.442695
        %v876 = vpow.pop %v875
        %v877 = vmul.f32 %v841, 1.442695
        %v878 = vpow.pop %v877
        %v879 = vmul.f32 %v842, 1.442695
        %v880 = vpow.pop %v879
        %v881 = vmul.f32 %v843, 1.442695
        %v882 = vpow.pop %v881
        %v883 = vmul.f32 %v844, 1.442695
        %v884 = vpow.pop %v883
        %v885 = vmul.f32 %v845, 1.442695
        %v886 = vpow.pop %v885
        %v887 = vmul.f32 %v846, 1.442695
        %v888 = vpow.pop %v887
        %v889 = vmul.f32 %v847, 1.442695
        %v890 = vpow.pop %v889
        %v891 = vmul.f32 %v848, 1.442695
        %v892 = vpow.pop %v891
        %v893 = vmul.f32 %v849, 1.442695
        %v894 = vpow.pop %v893
        %v895 = vmul.f32 %v850, 1.442695
        %v896 = vpow.pop %v895
        %v897 = vmul.f32 %v851, 1.442695
        %v898 = vpow.pop %v897
        %v899 = vmul.f32 %v852, 1.442695
        %v900 = vpow.pop %v899
        %v901 = vmul.f32 %v853, 1.442695
        %v902 = vpow.pop %v901
        %v903 = vmul.f32 %v854, 1.442695
        %v904 = vpow.pop %v903
        %v905 = vmul.f32 %v855, 1.442695
        %v906 = vpow.pop %v905
        %v907 = vmul.f32 %v856, 1.442695
        %v908 = vpow.pop %v907
        %v909 = vmul.f32 %v857, 1.442695
        %v910 = vpow.pop %v909
        %v911 = vmul.f32 %v858, 1.442695
        %v912 = vpow.pop %v911
        %v913 = vmul.f32 %v859, 1.442695
        %v914 = vpow.pop %v913
        %v915 = vmul.f32 %v860, 1.442695
        %v916 = vpow.pop %v915
        %v917 = vmul.f32 %v861, 1.442695
        %v918 = vpow.pop %v917
        %v919 = vmul.f32 %v862, 1.442695
        %v920 = vpow.pop %v919
        %v921 = vmul.f32 %v863, 1.442695
        %v922 = vpow.pop %v921
        %v923 = vmul.f32 %v864, 1.442695
        %v924 = vpow.pop %v923
        %v925 = vmul.f32 %v865, 1.442695
        %v926 = vpow.pop %v925
        %v927 = vmul.f32 %v866, 1.442695
        %v928 = vpow.pop %v927
        %v929 = vmul.f32 %v867, 1.442695
        %v930 = vpow.pop %v929
        %v931 = vmul.f32 %v868, 1.442695
        %v932 = vpow.pop %v931
        %v933 = vsub.f32 1.0, %v870
        %v934 = vsub.f32 1.0, %v872
        %v935 = vsub.f32 1.0, %v874
        %v936 = vsub.f32 1.0, %v876
        %v937 = vsub.f32 1.0, %v878
        %v938 = vsub.f32 1.0, %v880
        %v939 = vsub.f32 1.0, %v882
        %v940 = vsub.f32 1.0, %v884
        %v941 = vsub.f32 1.0, %v886
        %v942 = vsub.f32 1.0, %v888
        %v943 = vsub.f32 1.0, %v890
        %v944 = vsub.f32 1.0, %v892
        %v945 = vsub.f32 1.0, %v894
        %v946 = vsub.f32 1.0, %v896
        %v947 = vsub.f32 1.0, %v898
        %v948 = vsub.f32 1.0, %v900
        %v949 = vsub.f32 1.0, %v902
        %v950 = vsub.f32 1.0, %v904
        %v951 = vsub.f32 1.0, %v906
        %v952 = vsub.f32 1.0, %v908
        %v953 = vsub.f32 1.0, %v910
        %v954 = vsub.f32 1.0, %v912
        %v955 = vsub.f32 1.0, %v914
        %v956 = vsub.f32 1.0, %v916
        %v957 = vsub.f32 1.0, %v918
        %v958 = vsub.f32 1.0, %v920
        %v959 = vsub.f32 1.0, %v922
        %v960 = vsub.f32 1.0, %v924
        %v961 = vsub.f32 1.0, %v926
        %v962 = vsub.f32 1.0, %v928
        %v963 = vsub.f32 1.0, %v930
        %v964 = vsub.f32 1.0, %v932
        %v965 = vld [vmem:[#allocation2] sm:$0xff]
        %v966 = vld [vmem:[#allocation2 + $0x8] sm:$0xff]
        %v967 = vld [vmem:[#allocation2 + $0x10] sm:$0xff]
        %v968 = vld [vmem:[#allocation2 + $0x18] sm:$0xff]
        %v969 = vld [vmem:[#allocation2 + $0x20] sm:$0xff]
        %v970 = vld [vmem:[#allocation2 + $0x28] sm:$0xff]
        %v971 = vld [vmem:[#allocation2 + $0x30] sm:$0xff]
        %v972 = vld [vmem:[#allocation2 + $0x38] sm:$0xff]
        %v973 = vld [vmem:[#allocation2 + $0x40] sm:$0xff]
        %v974 = vld [vmem:[#allocation2 + $0x48] sm:$0xff]
        %v975 = vld [vmem:[#allocation2 + $0x50] sm:$0xff]
        %v976 = vld [vmem:[#allocation2 + $0x58] sm:$0xff]
        %v977 = vld [vmem:[#allocation2 + $0x60] sm:$0xff]
        %v978 = vld [vmem:[#allocation2 + $0x68] sm:$0xff]
        %v979 = vld [vmem:[#allocation2 + $0x70] sm:$0xff]
        %v980 = vld [vmem:[#allocation2 + $0x78] sm:$0xff]
        %981 = vmatprep.subr.mxu0 0.0
        %982 = vmatpush1.msra.mxu0 %v965
        %983 = vmatprep.subr.mxu0 0.0
        %984 = vmatpush1.msra.mxu0 %v966
        %985 = vmatprep.subr.mxu0 0.0
        %986 = vmatpush1.msra.mxu0 %v967
        %987 = vmatprep.subr.mxu0 0.0
        %988 = vmatpush1.msra.mxu0 %v968
        %989 = vmatprep.subr.mxu0 0.0
        %990 = vmatpush1.msra.mxu0 %v969
        %991 = vmatprep.subr.mxu0 0.0
        %992 = vmatpush1.msra.mxu0 %v970
        %993 = vmatprep.subr.mxu0 0.0
        %994 = vmatpush1.msra.mxu0 %v971
        %995 = vmatprep.subr.mxu0 0.0
        %996 = vmatpush1.msra.mxu0 %v972
        %997 = vmatprep.subr.mxu0 0.0
        %998 = vmatpush1.msra.mxu0 %v973
        %999 = vmatprep.subr.mxu0 0.0
        %1000 = vmatpush1.msra.mxu0 %v974
        %1001 = vmatprep.subr.mxu0 0.0
        %1002 = vmatpush1.msra.mxu0 %v975
        %1003 = vmatprep.subr.mxu0 0.0
        %1004 = vmatpush1.msra.mxu0 %v976
        %1005 = vmatprep.subr.mxu0 0.0
        %1006 = vmatpush1.msra.mxu0 %v977
        %1007 = vmatprep.subr.mxu0 0.0
        %1008 = vmatpush1.msra.mxu0 %v978
        %1009 = vmatprep.subr.mxu0 0.0
        %1010 = vmatpush1.msra.mxu0 %v979
        %1011 = vmatprep.subr.mxu0 0.0
        %1012 = vmatpush1.msra.mxu0 %v980
        %1013 = vmatprep.subr.mxu0 0.0
        %1014 = vmatpush1.msra.mxu0 0.0
        %1015 = vmatprep.subr.mxu0 0.0
        %1016 = vmatpush1.msra.mxu0 0.0
        %1017 = vmatprep.subr.mxu0 0.0
        %1018 = vmatpush1.msra.mxu0 0.0
        %1019 = vmatprep.subr.mxu0 0.0
        %1020 = vmatpush1.msra.mxu0 0.0
        %1021 = vmatprep.subr.mxu0 0.0
        %1022 = vmatpush1.msra.mxu0 0.0
        %1023 = vmatprep.subr.mxu0 0.0
        %1024 = vmatpush1.msra.mxu0 0.0
        %1025 = vmatprep.subr.mxu0 0.0
        %1026 = vmatpush1.msra.mxu0 0.0
        %1027 = vmatprep.subr.mxu0 0.0
        %1028 = vmatpush1.msra.mxu0 0.0
        %1029 = vmatprep.subr.mxu0 0.0
        %1030 = vmatpush1.msra.mxu0 0.0
        %1031 = vmatprep.subr.mxu0 0.0
        %1032 = vmatpush1.msra.mxu0 0.0
        %1033 = vmatprep.subr.mxu0 0.0
        %1034 = vmatpush1.msra.mxu0 0.0
        %1035 = vmatprep.subr.mxu0 0.0
        %1036 = vmatpush1.msra.mxu0 0.0
        %1037 = vmatprep.subr.mxu0 0.0
        %1038 = vmatpush1.msra.mxu0 0.0
        %1039 = vmatprep.subr.mxu0 0.0
        %1040 = vmatpush1.msra.mxu0 0.0
        %1041 = vmatprep.subr.mxu0 0.0
        %1042 = vmatpush1.msra.mxu0 0.0
        %1043 = vmatprep.subr.mxu0 0.0
        %1044 = vmatpush1.msra.mxu0 0.0
        %1045 = vmatprep.mubr.f32.mxu0 0.0
        %1046 = vmatmul.mubr.f32.gmra.mrb[0].mxu0 %v837
        %v1047 = vpop.f32.mrb[0].mxu0
        %v1048 = vadd.f32 0.0, %v1047
        %v1049 = vpop.f32.mrb[0].mxu0
        %1050 = vmatprep.mubr.f32.mxu0 0.0
        %1051 = vmatmul.mubr.f32.gmra.mrb[0].mxu0 %v838
        %v1052 = vpop.f32.mrb[0].mxu0
        %v1053 = vadd.f32 0.0, %v1052
        %v1054 = vpop.f32.mrb[0].mxu0
        %1055 = vmatprep.mubr.f32.mxu0 0.0
        %1056 = vmatmul.mubr.f32.gmra.mrb[0].mxu0 %v839
        %v1057 = vpop.f32.mrb[0].mxu0
        %v1058 = vadd.f32 0.0, %v1057
        %v1059 = vpop.f32.mrb[0].mxu0
        %1060 = vmatprep.mubr.f32.mxu0 0.0
        %1061 = vmatmul.mubr.f32.gmra.mrb[0].mxu0 %v840
        %v1062 = vpop.f32.mrb[0].mxu0
        %v1063 = vadd.f32 0.0, %v1062
        %v1064 = vpop.f32.mrb[0].mxu0
        %1065 = vmatprep.mubr.f32.mxu0 0.0
        %1066 = vmatmul.mubr.f32.gmra.mrb[0].mxu0 %v841
        %v1067 = vpop.f32.mrb[0].mxu0
        %v1068 = vadd.f32 0.0, %v1067
        %v1069 = vpop.f32.mrb[0].mxu0
        %1070 = vmatprep.mubr.f32.mxu0 0.0
        %1071 = vmatmul.mubr.f32.gmra.mrb[0].mxu0 %v842
        %v1072 = vpop.f32.mrb[0].mxu0
        %v1073 = vadd.f32 0.0, %v1072
        %v1074 = vpop.f32.mrb[0].mxu0
        %1075 = vmatprep.mubr.f32.mxu0 0.0
        %1076 = vmatmul.mubr.f32.gmra.mrb[0].mxu0 %v843
        %v1077 = vpop.f32.mrb[0].mxu0
        %v1078 = vadd.f32 0.0, %v1077
        %v1079 = vpop.f32.mrb[0].mxu0
        %1080 = vmatprep.mubr.f32.mxu0 0.0
        %1081 = vmatmul.mubr.f32.gmra.mrb[0].mxu0 %v844
        %v1082 = vpop.f32.mrb[0].mxu0
        %v1083 = vadd.f32 0.0, %v1082
        %v1084 = vpop.f32.mrb[0].mxu0
        %1085 = vmatprep.mubr.f32.mxu0 0.0
        %1086 = vmatmul.mubr.f32.gmra.mrb[0].mxu0 %v845
        %v1087 = vpop.f32.mrb[0].mxu0
        %v1088 = vadd.f32 0.0, %v1087
        %v1089 = vpop.f32.mrb[0].mxu0
        %1090 = vmatprep.mubr.f32.mxu0 0.0
        %1091 = vmatmul.mubr.f32.gmra.mrb[0].mxu0 %v846
        %v1092 = vpop.f32.mrb[0].mxu0
        %v1093 = vadd.f32 0.0, %v1092
        %v1094 = vpop.f32.mrb[0].mxu0
        %1095 = vmatprep.mubr.f32.mxu0 0.0
        %1096 = vmatmul.mubr.f32.gmra.mrb[0].mxu0 %v847
        %v1097 = vpop.f32.mrb[0].mxu0
        %v1098 = vadd.f32 0.0, %v1097
        %v1099 = vpop.f32.mrb[0].mxu0
        %1100 = vmatprep.mubr.f32.mxu0 0.0
        %1101 = vmatmul.mubr.f32.gmra.mrb[0].mxu0 %v848
        %v1102 = vpop.f32.mrb[0].mxu0
        %v1103 = vadd.f32 0.0, %v1102
        %v1104 = vpop.f32.mrb[0].mxu0
        %1105 = vmatprep.mubr.f32.mxu0 0.0
        %1106 = vmatmul.mubr.f32.gmra.mrb[0].mxu0 %v849
        %v1107 = vpop.f32.mrb[0].mxu0
        %v1108 = vadd.f32 0.0, %v1107
        %v1109 = vpop.f32.mrb[0].mxu0
        %1110 = vmatprep.mubr.f32.mxu0 0.0
        %1111 = vmatmul.mubr.f32.gmra.mrb[0].mxu0 %v850
        %v1112 = vpop.f32.mrb[0].mxu0
        %v1113 = vadd.f32 0.0, %v1112
        %v1114 = vpop.f32.mrb[0].mxu0
        %1115 = vmatprep.mubr.f32.mxu0 0.0
        %1116 = vmatmul.mubr.f32.gmra.mrb[0].mxu0 %v851
        %v1117 = vpop.f32.mrb[0].mxu0
        %v1118 = vadd.f32 0.0, %v1117
        %v1119 = vpop.f32.mrb[0].mxu0
        %1120 = vmatprep.mubr.f32.mxu0 0.0
        %1121 = vmatmul.mubr.f32.gmra.mrb[0].mxu0 %v852
        %v1122 = vpop.f32.mrb[0].mxu0
        %v1123 = vadd.f32 0.0, %v1122
        %v1124 = vpop.f32.mrb[0].mxu0
        %1125 = vmatprep.mubr.f32.mxu0 0.0
        %1126 = vmatmul.mubr.f32.gmra.mrb[0].mxu0 %v853
        %v1127 = vpop.f32.mrb[0].mxu0
        %v1128 = vadd.f32 0.0, %v1127
        %v1129 = vpop.f32.mrb[0].mxu0
        %1130 = vmatprep.mubr.f32.mxu0 0.0
        %1131 = vmatmul.mubr.f32.gmra.mrb[0].mxu0 %v854
        %v1132 = vpop.f32.mrb[0].mxu0
        %v1133 = vadd.f32 0.0, %v1132
        %v1134 = vpop.f32.mrb[0].mxu0
        %1135 = vmatprep.mubr.f32.mxu0 0.0
        %1136 = vmatmul.mubr.f32.gmra.mrb[0].mxu0 %v855
        %v1137 = vpop.f32.mrb[0].mxu0
        %v1138 = vadd.f32 0.0, %v1137
        %v1139 = vpop.f32.mrb[0].mxu0
        %1140 = vmatprep.mubr.f32.mxu0 0.0
        %1141 = vmatmul.mubr.f32.gmra.mrb[0].mxu0 %v856
        %v1142 = vpop.f32.mrb[0].mxu0
        %v1143 = vadd.f32 0.0, %v1142
        %v1144 = vpop.f32.mrb[0].mxu0
        %1145 = vmatprep.mubr.f32.mxu0 0.0
        %1146 = vmatmul.mubr.f32.gmra.mrb[0].mxu0 %v857
        %v1147 = vpop.f32.mrb[0].mxu0
        %v1148 = vadd.f32 0.0, %v1147
        %v1149 = vpop.f32.mrb[0].mxu0
        %1150 = vmatprep.mubr.f32.mxu0 0.0
        %1151 = vmatmul.mubr.f32.gmra.mrb[0].mxu0 %v858
        %v1152 = vpop.f32.mrb[0].mxu0
        %v1153 = vadd.f32 0.0, %v1152
        %v1154 = vpop.f32.mrb[0].mxu0
        %1155 = vmatprep.mubr.f32.mxu0 0.0
        %1156 = vmatmul.mubr.f32.gmra.mrb[0].mxu0 %v859
        %v1157 = vpop.f32.mrb[0].mxu0
        %v1158 = vadd.f32 0.0, %v1157
        %v1159 = vpop.f32.mrb[0].mxu0
        %1160 = vmatprep.mubr.f32.mxu0 0.0
        %1161 = vmatmul.mubr.f32.gmra.mrb[0].mxu0 %v860
        %v1162 = vpop.f32.mrb[0].mxu0
        %v1163 = vadd.f32 0.0, %v1162
        %v1164 = vpop.f32.mrb[0].mxu0
        %1165 = vmatprep.mubr.f32.mxu0 0.0
        %1166 = vmatmul.mubr.f32.gmra.mrb[0].mxu0 %v861
        %v1167 = vpop.f32.mrb[0].mxu0
        %v1168 = vadd.f32 0.0, %v1167
        %v1169 = vpop.f32.mrb[0].mxu0
        %1170 = vmatprep.mubr.f32.mxu0 0.0
        %1171 = vmatmul.mubr.f32.gmra.mrb[0].mxu0 %v862
        %v1172 = vpop.f32.mrb[0].mxu0
        %v1173 = vadd.f32 0.0, %v1172
        %v1174 = vpop.f32.mrb[0].mxu0
        %1175 = vmatprep.mubr.f32.mxu0 0.0
        %1176 = vmatmul.mubr.f32.gmra.mrb[0].mxu0 %v863
        %v1177 = vpop.f32.mrb[0].mxu0
        %v1178 = vadd.f32 0.0, %v1177
        %v1179 = vpop.f32.mrb[0].mxu0
        %1180 = vmatprep.mubr.f32.mxu0 0.0
        %1181 = vmatmul.mubr.f32.gmra.mrb[0].mxu0 %v864
        %v1182 = vpop.f32.mrb[0].mxu0
        %v1183 = vadd.f32 0.0, %v1182
        %v1184 = vpop.f32.mrb[0].mxu0
        %1185 = vmatprep.mubr.f32.mxu0 0.0
        %1186 = vmatmul.mubr.f32.gmra.mrb[0].mxu0 %v865
        %v1187 = vpop.f32.mrb[0].mxu0
        %v1188 = vadd.f32 0.0, %v1187
        %v1189 = vpop.f32.mrb[0].mxu0
        %1190 = vmatprep.mubr.f32.mxu0 0.0
        %1191 = vmatmul.mubr.f32.gmra.mrb[0].mxu0 %v866
        %v1192 = vpop.f32.mrb[0].mxu0
        %v1193 = vadd.f32 0.0, %v1192
        %v1194 = vpop.f32.mrb[0].mxu0
        %1195 = vmatprep.mubr.f32.mxu0 0.0
        %1196 = vmatmul.mubr.f32.gmra.mrb[0].mxu0 %v867
        %v1197 = vpop.f32.mrb[0].mxu0
        %v1198 = vadd.f32 0.0, %v1197
        %v1199 = vpop.f32.mrb[0].mxu0
        %1200 = vmatprep.mubr.f32.mxu0 0.0
        %1201 = vmatmul.mubr.f32.gmra.mrb[0].mxu0 %v868
        %v1202 = vpop.f32.mrb[0].mxu0
        %v1203 = vadd.f32 0.0, %v1202
        %v1204 = vpop.f32.mrb[0].mxu0
        %1205 = vdwg.mxu0
        %v1206 = vmul.f32 %v1048, 1.442695
        %v1207 = vpow.pop %v1206
        %v1208 = vmul.f32 %v1053, 1.442695
        %v1209 = vpow.pop %v1208
        %v1210 = vmul.f32 %v1058, 1.442695
        %v1211 = vpow.pop %v1210
        %v1212 = vmul.f32 %v1063, 1.442695
        %v1213 = vpow.pop %v1212
        %v1214 = vmul.f32 %v1068, 1.442695
        %v1215 = vpow.pop %v1214
        %v1216 = vmul.f32 %v1073, 1.442695
        %v1217 = vpow.pop %v1216
        %v1218 = vmul.f32 %v1078, 1.442695
        %v1219 = vpow.pop %v1218
        %v1220 = vmul.f32 %v1083, 1.442695
        %v1221 = vpow.pop %v1220
        %v1222 = vmul.f32 %v1088, 1.442695
        %v1223 = vpow.pop %v1222
        %v1224 = vmul.f32 %v1093, 1.442695
        %v1225 = vpow.pop %v1224
        %v1226 = vmul.f32 %v1098, 1.442695
        %v1227 = vpow.pop %v1226
        %v1228 = vmul.f32 %v1103, 1.442695
        %v1229 = vpow.pop %v1228
        %v1230 = vmul.f32 %v1108, 1.442695
        %v1231 = vpow.pop %v1230
        %v1232 = vmul.f32 %v1113, 1.442695
        %v1233 = vpow.pop %v1232
        %v1234 = vmul.f32 %v1118, 1.442695
        %v1235 = vpow.pop %v1234
        %v1236 = vmul.f32 %v1123, 1.442695
        %v1237 = vpow.pop %v1236
        %v1238 = vmul.f32 %v1128, 1.442695
        %v1239 = vpow.pop %v1238
        %v1240 = vmul.f32 %v1133, 1.442695
        %v1241 = vpow.pop %v1240
        %v1242 = vmul.f32 %v1138, 1.442695
        %v1243 = vpow.pop %v1242
        %v1244 = vmul.f32 %v1143, 1.442695
        %v1245 = vpow.pop %v1244
        %v1246 = vmul.f32 %v1148, 1.442695
        %v1247 = vpow.pop %v1246
        %v1248 = vmul.f32 %v1153, 1.442695
        %v1249 = vpow.pop %v1248
        %v1250 = vmul.f32 %v1158, 1.442695
        %v1251 = vpow.pop %v1250
        %v1252 = vmul.f32 %v1163, 1.442695
        %v1253 = vpow.pop %v1252
        %v1254 = vmul.f32 %v1168, 1.442695
        %v1255 = vpow.pop %v1254
        %v1256 = vmul.f32 %v1173, 1.442695
        %v1257 = vpow.pop %v1256
        %v1258 = vmul.f32 %v1178, 1.442695
        %v1259 = vpow.pop %v1258
        %v1260 = vmul.f32 %v1183, 1.442695
        %v1261 = vpow.pop %v1260
        %v1262 = vmul.f32 %v1188, 1.442695
        %v1263 = vpow.pop %v1262
        %v1264 = vmul.f32 %v1193, 1.442695
        %v1265 = vpow.pop %v1264
        %v1266 = vmul.f32 %v1198, 1.442695
        %v1267 = vpow.pop %v1266
        %v1268 = vmul.f32 %v1203, 1.442695
        %v1269 = vpow.pop %v1268
        %v1270 = vmul.f32 %v933, %v1207
        %v1271 = vmul.f32 %v934, %v1209
        %v1272 = vmul.f32 %v935, %v1211
        %v1273 = vmul.f32 %v936, %v1213
        %v1274 = vmul.f32 %v937, %v1215
        %v1275 = vmul.f32 %v938, %v1217
        %v1276 = vmul.f32 %v939, %v1219
        %v1277 = vmul.f32 %v940, %v1221
        %v1278 = vmul.f32 %v941, %v1223
        %v1279 = vmul.f32 %v942, %v1225
        %v1280 = vmul.f32 %v943, %v1227
        %v1281 = vmul.f32 %v944, %v1229
        %v1282 = vmul.f32 %v945, %v1231
        %v1283 = vmul.f32 %v946, %v1233
        %v1284 = vmul.f32 %v947, %v1235
        %v1285 = vmul.f32 %v948, %v1237
        %v1286 = vmul.f32 %v949, %v1239
        %v1287 = vmul.f32 %v950, %v1241
        %v1288 = vmul.f32 %v951, %v1243
        %v1289 = vmul.f32 %v952, %v1245
        %v1290 = vmul.f32 %v953, %v1247
        %v1291 = vmul.f32 %v954, %v1249
        %v1292 = vmul.f32 %v955, %v1251
        %v1293 = vmul.f32 %v956, %v1253
        %v1294 = vmul.f32 %v957, %v1255
        %v1295 = vmul.f32 %v958, %v1257
        %v1296 = vmul.f32 %v959, %v1259
        %v1297 = vmul.f32 %v960, %v1261
        %v1298 = vmul.f32 %v961, %v1263
        %v1299 = vmul.f32 %v962, %v1265
        %v1300 = vmul.f32 %v963, %v1267
        %v1301 = vmul.f32 %v964, %v1269
        %1302 = vst [vmem:[%s290] sm:$0xff] %v1270
        %1303 = vst [vmem:[%s290 + $0x8] sm:$0xff] %v1271
        %1304 = vst [vmem:[%s290 + $0x10] sm:$0xff] %v1272
        %1305 = vst [vmem:[%s290 + $0x18] sm:$0xff] %v1273
        %1306 = vst [vmem:[%s290 + $0x20] sm:$0xff] %v1274
        %1307 = vst [vmem:[%s290 + $0x28] sm:$0xff] %v1275
        %1308 = vst [vmem:[%s290 + $0x30] sm:$0xff] %v1276
        %1309 = vst [vmem:[%s290 + $0x38] sm:$0xff] %v1277
        %1310 = vst [vmem:[%s290 + $0x40] sm:$0xff] %v1278
        %1311 = vst [vmem:[%s290 + $0x48] sm:$0xff] %v1279
        %1312 = vst [vmem:[%s290 + $0x50] sm:$0xff] %v1280
        %1313 = vst [vmem:[%s290 + $0x58] sm:$0xff] %v1281
        %1314 = vst [vmem:[%s290 + $0x60] sm:$0xff] %v1282
        %1315 = vst [vmem:[%s290 + $0x68] sm:$0xff] %v1283
        %1316 = vst [vmem:[%s290 + $0x70] sm:$0xff] %v1284
        %1317 = vst [vmem:[%s290 + $0x78] sm:$0xff] %v1285
        %1318 = vst [vmem:[%s290 + $0x80] sm:$0xff] %v1286
        %1319 = vst [vmem:[%s290 + $0x88] sm:$0xff] %v1287
        %1320 = vst [vmem:[%s290 + $0x90] sm:$0xff] %v1288
        %1321 = vst [vmem:[%s290 + $0x98] sm:$0xff] %v1289
        %1322 = vst [vmem:[%s290 + $0xa0] sm:$0xff] %v1290
        %1323 = vst [vmem:[%s290 + $0xa8] sm:$0xff] %v1291
        %1324 = vst [vmem:[%s290 + $0xb0] sm:$0xff] %v1292
        %1325 = vst [vmem:[%s290 + $0xb8] sm:$0xff] %v1293
        %1326 = vst [vmem:[%s290 + $0xc0] sm:$0xff] %v1294
        %1327 = vst [vmem:[%s290 + $0xc8] sm:$0xff] %v1295
        %1328 = vst [vmem:[%s290 + $0xd0] sm:$0xff] %v1296
        %1329 = vst [vmem:[%s290 + $0xd8] sm:$0xff] %v1297
        %1330 = vst [vmem:[%s290 + $0xe0] sm:$0xff] %v1298
        %1331 = vst [vmem:[%s290 + $0xe8] sm:$0xff] %v1299
        %1332 = vst [vmem:[%s290 + $0xf0] sm:$0xff] %v1300
        %1333 = vst [vmem:[%s290 + $0xf8] sm:$0xff] %v1301
        %v1334 = vmul.f32 %v1270, %v318
        %v1335 = vmul.f32 %v1271, %v319
        %v1336 = vmul.f32 %v1272, %v320
        %v1337 = vmul.f32 %v1273, %v321
        %v1338 = vmul.f32 %v1274, %v322
        %v1339 = vmul.f32 %v1275, %v323
        %v1340 = vmul.f32 %v1276, %v324
        %v1341 = vmul.f32 %v1277, %v325
        %v1342 = vmul.f32 %v1278, %v326
        %v1343 = vmul.f32 %v1279, %v327
        %v1344 = vmul.f32 %v1280, %v328
        %v1345 = vmul.f32 %v1281, %v329
        %v1346 = vmul.f32 %v1282, %v330
        %v1347 = vmul.f32 %v1283, %v331
        %v1348 = vmul.f32 %v1284, %v332
        %v1349 = vmul.f32 %v1285, %v333
        %v1350 = vmul.f32 %v1286, %v334
        %v1351 = vmul.f32 %v1287, %v335
        %v1352 = vmul.f32 %v1288, %v336
        %v1353 = vmul.f32 %v1289, %v337
        %v1354 = vmul.f32 %v1290, %v338
        %v1355 = vmul.f32 %v1291, %v339
        %v1356 = vmul.f32 %v1292, %v340
        %v1357 = vmul.f32 %v1293, %v341
        %v1358 = vmul.f32 %v1294, %v342
        %v1359 = vmul.f32 %v1295, %v343
        %v1360 = vmul.f32 %v1296, %v344
        %v1361 = vmul.f32 %v1297, %v345
        %v1362 = vmul.f32 %v1298, %v346
        %v1363 = vmul.f32 %v1299, %v347
        %v1364 = vmul.f32 %v1300, %v348
        %v1365 = vmul.f32 %v1301, %v349
        %1366 = vadd.xlane.f32.xlu0 %v1334
        %v1367 = vpop.xlane.xlu0 %1366
        %1368 = vadd.xlane.f32.xlu0 %v1335
        %v1369 = vpop.xlane.xlu0 %1368
        %1370 = vadd.xlane.f32.xlu0 %v1336
        %v1371 = vpop.xlane.xlu0 %1370
        %1372 = vadd.xlane.f32.xlu0 %v1337
        %v1373 = vpop.xlane.xlu0 %1372
        %1374 = vadd.xlane.f32.xlu0 %v1338
        %v1375 = vpop.xlane.xlu0 %1374
        %1376 = vadd.xlane.f32.xlu0 %v1339
        %v1377 = vpop.xlane.xlu0 %1376
        %1378 = vadd.xlane.f32.xlu0 %v1340
        %v1379 = vpop.xlane.xlu0 %1378
        %1380 = vadd.xlane.f32.xlu0 %v1341
        %v1381 = vpop.xlane.xlu0 %1380
        %1382 = vadd.xlane.f32.xlu0 %v1342
        %v1383 = vpop.xlane.xlu0 %1382
        %1384 = vadd.xlane.f32.xlu0 %v1343
        %v1385 = vpop.xlane.xlu0 %1384
        %1386 = vadd.xlane.f32.xlu0 %v1344
        %v1387 = vpop.xlane.xlu0 %1386
        %1388 = vadd.xlane.f32.xlu0 %v1345
        %v1389 = vpop.xlane.xlu0 %1388
        %1390 = vadd.xlane.f32.xlu0 %v1346
        %v1391 = vpop.xlane.xlu0 %1390
        %1392 = vadd.xlane.f32.xlu0 %v1347
        %v1393 = vpop.xlane.xlu0 %1392
        %1394 = vadd.xlane.f32.xlu0 %v1348
        %v1395 = vpop.xlane.xlu0 %1394
        %1396 = vadd.xlane.f32.xlu0 %v1349
        %v1397 = vpop.xlane.xlu0 %1396
        %1398 = vadd.xlane.f32.xlu0 %v1350
        %v1399 = vpop.xlane.xlu0 %1398
        %1400 = vadd.xlane.f32.xlu0 %v1351
        %v1401 = vpop.xlane.xlu0 %1400
        %1402 = vadd.xlane.f32.xlu0 %v1352
        %v1403 = vpop.xlane.xlu0 %1402
        %1404 = vadd.xlane.f32.xlu0 %v1353
        %v1405 = vpop.xlane.xlu0 %1404
        %1406 = vadd.xlane.f32.xlu0 %v1354
        %v1407 = vpop.xlane.xlu0 %1406
        %1408 = vadd.xlane.f32.xlu0 %v1355
        %v1409 = vpop.xlane.xlu0 %1408
        %1410 = vadd.xlane.f32.xlu0 %v1356
        %v1411 = vpop.xlane.xlu0 %1410
        %1412 = vadd.xlane.f32.xlu0 %v1357
        %v1413 = vpop.xlane.xlu0 %1412
        %1414 = vadd.xlane.f32.xlu0 %v1358
        %v1415 = vpop.xlane.xlu0 %1414
        %1416 = vadd.xlane.f32.xlu0 %v1359
        %v1417 = vpop.xlane.xlu0 %1416
        %1418 = vadd.xlane.f32.xlu0 %v1360
        %v1419 = vpop.xlane.xlu0 %1418
        %1420 = vadd.xlane.f32.xlu0 %v1361
        %v1421 = vpop.xlane.xlu0 %1420
        %1422 = vadd.xlane.f32.xlu0 %v1362
        %v1423 = vpop.xlane.xlu0 %1422
        %1424 = vadd.xlane.f32.xlu0 %v1363
        %v1425 = vpop.xlane.xlu0 %1424
        %1426 = vadd.xlane.f32.xlu0 %v1364
        %v1427 = vpop.xlane.xlu0 %1426
        %1428 = vadd.xlane.f32.xlu0 %v1365
        %v1429 = vpop.xlane.xlu0 %1428
        %vm1430 = vcmask 7168
        %1431 = vst.msk [vmem:[%s316] sm:$0xff] %vm1430, %v1367
        %1432 = vst.msk [vmem:[%s316 + $0x8] sm:$0xff] %vm1430, %v1369
        %1433 = vst.msk [vmem:[%s316 + $0x10] sm:$0xff] %vm1430, %v1371
        %1434 = vst.msk [vmem:[%s316 + $0x18] sm:$0xff] %vm1430, %v1373
        %1435 = vst.msk [vmem:[%s316 + $0x20] sm:$0xff] %vm1430, %v1375
        %1436 = vst.msk [vmem:[%s316 + $0x28] sm:$0xff] %vm1430, %v1377
        %1437 = vst.msk [vmem:[%s316 + $0x30] sm:$0xff] %vm1430, %v1379
        %1438 = vst.msk [vmem:[%s316 + $0x38] sm:$0xff] %vm1430, %v1381
        %1439 = vst.msk [vmem:[%s316 + $0x40] sm:$0xff] %vm1430, %v1383
        %1440 = vst.msk [vmem:[%s316 + $0x48] sm:$0xff] %vm1430, %v1385
        %1441 = vst.msk [vmem:[%s316 + $0x50] sm:$0xff] %vm1430, %v1387
        %1442 = vst.msk [vmem:[%s316 + $0x58] sm:$0xff] %vm1430, %v1389
        %1443 = vst.msk [vmem:[%s316 + $0x60] sm:$0xff] %vm1430, %v1391
        %1444 = vst.msk [vmem:[%s316 + $0x68] sm:$0xff] %vm1430, %v1393
        %1445 = vst.msk [vmem:[%s316 + $0x70] sm:$0xff] %vm1430, %v1395
        %1446 = vst.msk [vmem:[%s316 + $0x78] sm:$0xff] %vm1430, %v1397
        %1447 = vst.msk [vmem:[%s316 + $0x80] sm:$0xff] %vm1430, %v1399
        %1448 = vst.msk [vmem:[%s316 + $0x88] sm:$0xff] %vm1430, %v1401
        %1449 = vst.msk [vmem:[%s316 + $0x90] sm:$0xff] %vm1430, %v1403
        %1450 = vst.msk [vmem:[%s316 + $0x98] sm:$0xff] %vm1430, %v1405
        %1451 = vst.msk [vmem:[%s316 + $0xa0] sm:$0xff] %vm1430, %v1407
        %1452 = vst.msk [vmem:[%s316 + $0xa8] sm:$0xff] %vm1430, %v1409
        %1453 = vst.msk [vmem:[%s316 + $0xb0] sm:$0xff] %vm1430, %v1411
        %1454 = vst.msk [vmem:[%s316 + $0xb8] sm:$0xff] %vm1430, %v1413
        %1455 = vst.msk [vmem:[%s316 + $0xc0] sm:$0xff] %vm1430, %v1415
        %1456 = vst.msk [vmem:[%s316 + $0xc8] sm:$0xff] %vm1430, %v1417
        %1457 = vst.msk [vmem:[%s316 + $0xd0] sm:$0xff] %vm1430, %v1419
        %1458 = vst.msk [vmem:[%s316 + $0xd8] sm:$0xff] %vm1430, %v1421
        %1459 = vst.msk [vmem:[%s316 + $0xe0] sm:$0xff] %vm1430, %v1423
        %1460 = vst.msk [vmem:[%s316 + $0xe8] sm:$0xff] %vm1430, %v1425
        %1461 = vst.msk [vmem:[%s316 + $0xf0] sm:$0xff] %vm1430, %v1427
        %1462 = vst.msk [vmem:[%s316 + $0xf8] sm:$0xff] %vm1430, %v1429
        %1463 = vadd.xlane.f32.xlu0 %v1270
        %v1464 = vpop.xlane.xlu0 %1463
        %1465 = vadd.xlane.f32.xlu0 %v1271
        %v1466 = vpop.xlane.xlu0 %1465
        %1467 = vadd.xlane.f32.xlu0 %v1272
        %v1468 = vpop.xlane.xlu0 %1467
        %1469 = vadd.xlane.f32.xlu0 %v1273
        %v1470 = vpop.xlane.xlu0 %1469
        %1471 = vadd.xlane.f32.xlu0 %v1274
        %v1472 = vpop.xlane.xlu0 %1471
        %1473 = vadd.xlane.f32.xlu0 %v1275
        %v1474 = vpop.xlane.xlu0 %1473
        %1475 = vadd.xlane.f32.xlu0 %v1276
        %v1476 = vpop.xlane.xlu0 %1475
        %1477 = vadd.xlane.f32.xlu0 %v1277
        %v1478 = vpop.xlane.xlu0 %1477
        %1479 = vadd.xlane.f32.xlu0 %v1278
        %v1480 = vpop.xlane.xlu0 %1479
        %1481 = vadd.xlane.f32.xlu0 %v1279
        %v1482 = vpop.xlane.xlu0 %1481
        %1483 = vadd.xlane.f32.xlu0 %v1280
        %v1484 = vpop.xlane.xlu0 %1483
        %1485 = vadd.xlane.f32.xlu0 %v1281
        %v1486 = vpop.xlane.xlu0 %1485
        %1487 = vadd.xlane.f32.xlu0 %v1282
        %v1488 = vpop.xlane.xlu0 %1487
        %1489 = vadd.xlane.f32.xlu0 %v1283
        %v1490 = vpop.xlane.xlu0 %1489
        %1491 = vadd.xlane.f32.xlu0 %v1284
        %v1492 = vpop.xlane.xlu0 %1491
        %1493 = vadd.xlane.f32.xlu0 %v1285
        %v1494 = vpop.xlane.xlu0 %1493
        %1495 = vadd.xlane.f32.xlu0 %v1286
        %v1496 = vpop.xlane.xlu0 %1495
        %1497 = vadd.xlane.f32.xlu0 %v1287
        %v1498 = vpop.xlane.xlu0 %1497
        %1499 = vadd.xlane.f32.xlu0 %v1288
        %v1500 = vpop.xlane.xlu0 %1499
        %1501 = vadd.xlane.f32.xlu0 %v1289
        %v1502 = vpop.xlane.xlu0 %1501
        %1503 = vadd.xlane.f32.xlu0 %v1290
        %v1504 = vpop.xlane.xlu0 %1503
        %1505 = vadd.xlane.f32.xlu0 %v1291
        %v1506 = vpop.xlane.xlu0 %1505
        %1507 = vadd.xlane.f32.xlu0 %v1292
        %v1508 = vpop.xlane.xlu0 %1507
        %1509 = vadd.xlane.f32.xlu0 %v1293
        %v1510 = vpop.xlane.xlu0 %1509
        %1511 = vadd.xlane.f32.xlu0 %v1294
        %v1512 = vpop.xlane.xlu0 %1511
        %1513 = vadd.xlane.f32.xlu0 %v1295
        %v1514 = vpop.xlane.xlu0 %1513
        %1515 = vadd.xlane.f32.xlu0 %v1296
        %v1516 = vpop.xlane.xlu0 %1515
        %1517 = vadd.xlane.f32.xlu0 %v1297
        %v1518 = vpop.xlane.xlu0 %1517
        %1519 = vadd.xlane.f32.xlu0 %v1298
        %v1520 = vpop.xlane.xlu0 %1519
        %1521 = vadd.xlane.f32.xlu0 %v1299
        %v1522 = vpop.xlane.xlu0 %1521
        %1523 = vadd.xlane.f32.xlu0 %v1300
        %v1524 = vpop.xlane.xlu0 %1523
        %1525 = vadd.xlane.f32.xlu0 %v1301
        %v1526 = vpop.xlane.xlu0 %1525
        %vm1527 = vcmask 15368
        %1528 = vst.msk [vmem:[%s316] sm:$0xff] %vm1527, %v1464
        %1529 = vst.msk [vmem:[%s316 + $0x8] sm:$0xff] %vm1527, %v1466
        %1530 = vst.msk [vmem:[%s316 + $0x10] sm:$0xff] %vm1527, %v1468
        %1531 = vst.msk [vmem:[%s316 + $0x18] sm:$0xff] %vm1527, %v1470
        %1532 = vst.msk [vmem:[%s316 + $0x20] sm:$0xff] %vm1527, %v1472
        %1533 = vst.msk [vmem:[%s316 + $0x28] sm:$0xff] %vm1527, %v1474
        %1534 = vst.msk [vmem:[%s316 + $0x30] sm:$0xff] %vm1527, %v1476
        %1535 = vst.msk [vmem:[%s316 + $0x38] sm:$0xff] %vm1527, %v1478
        %1536 = vst.msk [vmem:[%s316 + $0x40] sm:$0xff] %vm1527, %v1480
        %1537 = vst.msk [vmem:[%s316 + $0x48] sm:$0xff] %vm1527, %v1482
        %1538 = vst.msk [vmem:[%s316 + $0x50] sm:$0xff] %vm1527, %v1484
        %1539 = vst.msk [vmem:[%s316 + $0x58] sm:$0xff] %vm1527, %v1486
        %1540 = vst.msk [vmem:[%s316 + $0x60] sm:$0xff] %vm1527, %v1488
        %1541 = vst.msk [vmem:[%s316 + $0x68] sm:$0xff] %vm1527, %v1490
        %1542 = vst.msk [vmem:[%s316 + $0x70] sm:$0xff] %vm1527, %v1492
        %1543 = vst.msk [vmem:[%s316 + $0x78] sm:$0xff] %vm1527, %v1494
        %1544 = vst.msk [vmem:[%s316 + $0x80] sm:$0xff] %vm1527, %v1496
        %1545 = vst.msk [vmem:[%s316 + $0x88] sm:$0xff] %vm1527, %v1498
        %1546 = vst.msk [vmem:[%s316 + $0x90] sm:$0xff] %vm1527, %v1500
        %1547 = vst.msk [vmem:[%s316 + $0x98] sm:$0xff] %vm1527, %v1502
        %1548 = vst.msk [vmem:[%s316 + $0xa0] sm:$0xff] %vm1527, %v1504
        %1549 = vst.msk [vmem:[%s316 + $0xa8] sm:$0xff] %vm1527, %v1506
        %1550 = vst.msk [vmem:[%s316 + $0xb0] sm:$0xff] %vm1527, %v1508
        %1551 = vst.msk [vmem:[%s316 + $0xb8] sm:$0xff] %vm1527, %v1510
        %1552 = vst.msk [vmem:[%s316 + $0xc0] sm:$0xff] %vm1527, %v1512
        %1553 = vst.msk [vmem:[%s316 + $0xc8] sm:$0xff] %vm1527, %v1514
        %1554 = vst.msk [vmem:[%s316 + $0xd0] sm:$0xff] %vm1527, %v1516
        %1555 = vst.msk [vmem:[%s316 + $0xd8] sm:$0xff] %vm1527, %v1518
        %1556 = vst.msk [vmem:[%s316 + $0xe0] sm:$0xff] %vm1527, %v1520
        %1557 = vst.msk [vmem:[%s316 + $0xe8] sm:$0xff] %vm1527, %v1522
        %1558 = vst.msk [vmem:[%s316 + $0xf0] sm:$0xff] %vm1527, %v1524
        %1559 = vst.msk [vmem:[%s316 + $0xf8] sm:$0xff] %vm1527, %v1526
        %s1560 = sand.u32 %s131, 1
        %s1561 = scalar_lea.sflag [#allocation4], %s1560
        %s1562 = sand.u32 %s131, 1
        %s1563 = smul.addr %s1562, 256
        %s1564 = scalar_lea.vmem [#allocation7], %s1563
        %s1565 = smul.u32 32, %s24
        %p1566 = scmp.lt.s32.totalorder %s1565, 63
        %s1567 = scalar_select %p1566, %s1565, 63
        %s1568 = smul.addr %s1567, 8
        %s1569 = scalar_lea.vmem %s5, %s1568
        // Predicated region
        $region45: #{tpu_custom_call.1} parent=35 // pred_check
          %p1570 = pneg %p141
        $region46: #{tpu_custom_call.1} parent=35 // pred_check_branch
          %1572 = sbr.rel (%p1570) target = $region48
        $region47: #{tpu_custom_call.1} parent=35 // pred_region
          %s1573 = smul.u32 32, %s24
          %s1575 = ssub.s32 4096, 4096
          %1576 = vsyncadd %s1561, %s1575
          %s1577 = smul.addr %s1573, 128
          %s1578 = scalar_lea.hbm %s4, %s1577
          %s1579 = sshll.u32 %s1564, 4
          %s1580 = int_to_ptr.vmem [resolvable:$true] %s1579
          %1585 = dma.vmem_to_hbm [thread:$0]  %s1580, 4096, %s1578, %s1561, 128, 128, 8
        $region48: #{tpu_custom_call.1} parent=35 // pred_fallthru
          _
        // Predicated region
        $region49: #{tpu_custom_call.1} parent=35 // pred_check
          %p1586 = pneg %p167
        $region50: #{tpu_custom_call.1} parent=35 // pred_check_branch
          %1588 = sbr.rel (%p1586) target = $region52
        $region51: #{tpu_custom_call.1} parent=35 // pred_region
          %s1589 = smul.u32 32, %s24
        $region52: #{tpu_custom_call.1} parent=35 // pred_fallthru
          _
      $region36: #{tpu_custom_call.1} parent=5 // pred_fallthru
        _
      %p1590 = scmp.le.s32.totalorder 2, %s19
      // Predicated region
      $region53: #{tpu_custom_call.1} parent=5 // pred_check
        %p1591 = pneg %p1590
      $region54: #{tpu_custom_call.1} parent=5 // pred_check_branch
        %1593 = sbr.rel (%p1591) target = $region56
      $region55: #{tpu_custom_call.1} parent=5 // pred_region
        %s1594 = ssub.s32 %s19, 2
        // Predicated region
        $region57: #{tpu_custom_call.1} parent=55 // pred_check
          %p1595 = pneg %p147
        $region58: #{tpu_custom_call.1} parent=55 // pred_check_branch
          %1597 = sbr.rel (%p1595) target = $region60
        $region59: #{tpu_custom_call.1} parent=55 // pred_region
          %s1598 = sand.u32 %s132, 1
          %s1599 = scalar_lea.sflag [#allocation4], %s1598
          %s1600 = sand.u32 %s132, 1
          %s1601 = smul.addr %s1600, 256
          %s1602 = scalar_lea.vmem [#allocation7], %s1601
          %1603 = dma.done %s1599, 4096
        $region60: #{tpu_custom_call.1} parent=55 // pred_fallthru
          _
        // Predicated region
        $region61: #{tpu_custom_call.1} parent=55 // pred_check
          %p1604 = pneg %p173
        $region62: #{tpu_custom_call.1} parent=55 // pred_check_branch
          %1606 = sbr.rel (%p1604) target = $region64
        $region63: #{tpu_custom_call.1} parent=55 // pred_region
          %s1607 = smul.u32 32, %s25
          %p1608 = scmp.lt.s32.totalorder %s1607, 63
          %s1609 = scalar_select %p1608, %s1607, 63
          %s1610 = smul.addr %s1609, 8
          %s1611 = scalar_lea.vmem %s5, %s1610
        $region64: #{tpu_custom_call.1} parent=55 // pred_fallthru
          _
      $region56: #{tpu_custom_call.1} parent=5 // pred_fallthru
        _
    $region6: #{tpu_custom_call.1} parent=1 // loop_footer
      %s23 = sadd.s32 1, %s19
    $region7: #{tpu_custom_call.1} parent=1 // loop_footer_branch
      %18 = sbr.rel target = $region3
    $region8: #{tpu_custom_call.1} parent=1 // loop_exit
      _
    %1612 = vsyncpa [#allocation3], 1
    %s1613 = scalar_lea.sflag [#allocation3], 1
    %1614 = vsyncpa %s1613, 1
    %1615 = vsyncpa [#allocation6], 1
    %s1616 = scalar_lea.sflag [#allocation6], 1
    %1617 = vsyncpa %s1616, 1
    %1618 = vsyncpa [#allocation4], 1
    %s1619 = scalar_lea.sflag [#allocation4], 1
    %1620 = vsyncpa %s1619, 1

</llo_original>
